<compile_context>
chip_gen: v6e
topology: v6e:2x2x1
jax: 0.10.0
libtpu: 0.0.40
codegen_flags: <defaults>
</compile_context>

<pallas_src>
import jax
import jax.numpy as jnp
from jax import lax
from jax.experimental import pallas as pl
from jax.experimental.pallas import tpu as pltpu

# Constants from the PyTorch module.
CLAMP_MIN = 0.365801
CLAMP_MAX = 1.5579

# MaxPool2d(5, stride=3, padding=2), applied twice on the live path.
K = 5
S = 3
P = 2


def _pool_out(n):
    return (n + 2 * P - K) // S + 1


def _pool_w_row(row, w_out):
    """MaxPool(K, S, pad=P) along the lane (last) axis of a (c, w_in) row.

    The -inf padding reproduces MaxPool2d's implicit padding exactly (it never
    wins a max and every window overlaps real data).  The K window taps are K
    shifted full-width lane slices of the padded row (shared rolling max); the
    stride-S selection is one width-1 slice per output column.
    """
    c, w_in = row.shape
    pad = jnp.full((c, P), -jnp.inf, dtype=row.dtype)
    padded = jnp.concatenate([pad, row, pad], axis=1)           # (c, w_in + 2P)
    span = S * (w_out - 1) + 1                                  # lanes we need
    m = padded[:, 0:span]
    for d in range(1, K):
        m = jnp.maximum(m, padded[:, d:d + span])               # rolling max
    cols = [m[:, S * j:S * j + 1] for j in range(w_out)]        # stride-S pick
    return jnp.concatenate(cols, axis=1)                        # (c, w_out)


def _pool_h_row(read_row, i, h_in):
    """Max over the (statically clipped) K input rows feeding output row i."""
    lo = max(i * S - P, 0)
    hi = min(i * S - P + K, h_in)
    acc = read_row(lo)
    for r in range(lo + 1, hi):
        acc = jnp.maximum(acc, read_row(r))
    return acc


def _make_kernel(h, w):
    h1, w1 = _pool_out(h), _pool_out(w)
    h2, w2 = _pool_out(h1), _pool_out(w1)

    def kernel(x_ref, o_ref, t1_ref):
        # ---- First MaxPool2d(5,3,pad=2): stream rows into VMEM scratch. ----
        # Live intermediate per step is one (c_blk, w) row; each result row is
        # written to scratch immediately, bounding live ranges.
        for i in range(h1):
            hrow = _pool_h_row(lambda r: x_ref[:, r, :], i, h)   # (c_blk, w)
            t1_ref[:, i, :] = _pool_w_row(hrow, w1)              # (c_blk, w1)

        # ---- Second MaxPool2d + clamp_min/clamp_max + *2, streamed out. ----
        for i in range(h2):
            hrow = _pool_h_row(lambda r: t1_ref[:, r, :], i, h1)  # (c_blk, w1)
            row = _pool_w_row(hrow, w2)                           # (c_blk, w2)
            row = 2.0 * jnp.minimum(jnp.maximum(row, CLAMP_MIN), CLAMP_MAX)
            o_ref[:, i, :] = row.astype(o_ref.dtype)

    return kernel, (h1, w1), (h2, w2)


def _pick_c_block(nc, h, w, itemsize, budget_bytes=8 << 20):
    """Channels per grid step.

    Largest divisor of N*C whose input block stays under ~8 MiB (good DMA
    amortization on v6e/v7x, still fine on v5e once vmem_limit_bytes is set),
    additionally capped at N*C//2 so the grid has >= 2 parallel steps whenever
    possible (v7x megacore + pipelining on all generations).
    """
    per_chan = h * w * itemsize
    cap = max(1, budget_bytes // per_chan)
    if nc >= 2:
        cap = min(cap, max(1, nc // 2))
    cap = min(cap, nc)
    for blk in range(cap, 0, -1):
        if nc % blk == 0:
            return blk
    return 1


def model_forward(x):
    """x: (N, C, H, W) float -> (N, C, H2, W2), same dtype as x."""
    n, c, h, w = x.shape
    nc = n * c
    dtype = x.dtype
    itemsize = jnp.dtype(dtype).itemsize

    kern, (h1, w1), (h2, w2) = _make_kernel(h, w)

    # Free reshape only — NO transpose, NO dtype cast: the kernel reads NCHW
    # blocks directly from HBM.
    xr = x.reshape(nc, h, w)

    c_blk = _pick_c_block(nc, h, w, itemsize)
    grid = (nc // c_blk,)

    in_blk_bytes = c_blk * h * w * itemsize
    out_blk_bytes = c_blk * h2 * w2 * itemsize
    scratch_bytes = c_blk * h1 * w1 * itemsize
    # Double-buffered in/out blocks + scratch + slack; explicit so bigger
    # blocks don't trip the per-generation scoped-VMEM defaults.
    vmem_limit = int(min(100 << 20,
                         max(2 * in_blk_bytes + 2 * out_blk_bytes
                             + scratch_bytes + (2 << 20), 16 << 20)))

    out = pl.pallas_call(
        kern,
        out_shape=jax.ShapeDtypeStruct((nc, h2, w2), dtype),
        grid_spec=pltpu.PrefetchScalarGridSpec(
            num_scalar_prefetch=0,
            grid=grid,
            in_specs=[pl.BlockSpec((c_blk, h, w), lambda g: (g, 0, 0))],
            out_specs=pl.BlockSpec((c_blk, h2, w2), lambda g: (g, 0, 0)),
            scratch_shapes=[pltpu.VMEM((c_blk, h1, w1), dtype)],
        ),
        compiler_params=pltpu.CompilerParams(
            dimension_semantics=("parallel",),
            vmem_limit_bytes=vmem_limit),
    )(xr)

    return out.reshape(n, c, h2, w2)


def _reference(x):
    """Pure-JAX reference reproducing the PyTorch forward (for validation)."""
    def mp(y):
        return lax.reduce_window(
            y, -jnp.inf, lax.max,
            window_dimensions=(1, 1, K, K),
            window_strides=(1, 1, S, S),
            padding=((0, 0), (0, 0), (P, P), (P, P)),
        )
    v3 = mp(mp(x))
    return 2.0 * jnp.minimum(jnp.maximum(v3, CLAMP_MIN), CLAMP_MAX)


if __name__ == "__main__":
    # Small shape consistent with the module: batch=2, channels=4, spatial=16.
    x_small = jax.random.normal(jax.random.PRNGKey(0), (2, 4, 16, 16),
                                dtype=jnp.float32)
    out = jax.block_until_ready(model_forward(x_small))
    ref = jax.block_until_ready(_reference(x_small))
    assert out.shape == ref.shape, (out.shape, ref.shape)
    assert jnp.allclose(out, ref, atol=1e-6, rtol=1e-6), "mismatch (small)"

    # Also validate on the module's own example shape (1, 8, 58, 58).
    x_spec = jax.random.normal(jax.random.PRNGKey(1), (1, 8, 58, 58),
                               dtype=jnp.float32)
    out2 = jax.block_until_ready(model_forward(x_spec))
    ref2 = jax.block_until_ready(_reference(x_spec))
    assert out2.shape == ref2.shape, (out2.shape, ref2.shape)
    assert jnp.allclose(out2, ref2, atol=1e-6, rtol=1e-6), "mismatch (spec)"

    print("KERNEL_OK")
</pallas_src>

<mosaic_0001>
module attributes {stable_mosaic.version = 11 : i64} {
  func.func @kernel(%arg0: i32, %arg1: memref<4x16x16xf32, #tpu.memory_space<vmem>>, %arg2: memref<4x2x2xf32, #tpu.memory_space<vmem>>, %arg3: memref<4x6x6xf32, #tpu.memory_space<vmem>>) attributes {dimension_semantics = [#tpu.dimension_semantics<parallel>], iteration_bounds = array<i64: 2>, scalar_prefetch = 0 : i64, scratch_operands = 1 : i64, tpu.core_type = #tpu.core_type<tc>, window_params = [{transform_indices = @transform_0, window_bounds = array<i64: 4, 16, 16>}, {transform_indices = @transform_1, window_bounds = array<i64: 4, 2, 2>}]} {
    %c0 = arith.constant 0 : index
    %c0_0 = arith.constant 0 : index
    %c0_1 = arith.constant 0 : index
    %0 = vector.load %arg1[%c0, %c0_0, %c0_1] : memref<4x16x16xf32, #tpu.memory_space<vmem>>, vector<4x1x16xf32>
    %1 = vector.shape_cast %0 : vector<4x1x16xf32> to vector<4x16xf32>
    %c0_2 = arith.constant 0 : index
    %c1 = arith.constant 1 : index
    %c0_3 = arith.constant 0 : index
    %2 = vector.load %arg1[%c0_2, %c1, %c0_3] : memref<4x16x16xf32, #tpu.memory_space<vmem>>, vector<4x1x16xf32>
    %3 = vector.shape_cast %2 : vector<4x1x16xf32> to vector<4x16xf32>
    %4 = arith.maximumf %1, %3 : vector<4x16xf32>
    %c0_4 = arith.constant 0 : index
    %c2 = arith.constant 2 : index
    %c0_5 = arith.constant 0 : index
    %5 = vector.load %arg1[%c0_4, %c2, %c0_5] : memref<4x16x16xf32, #tpu.memory_space<vmem>>, vector<4x1x16xf32>
    %6 = vector.shape_cast %5 : vector<4x1x16xf32> to vector<4x16xf32>
    %7 = arith.maximumf %4, %6 : vector<4x16xf32>
    %cst = arith.constant 0xFF800000 : f32
    %8 = vector.broadcast %cst : f32 to vector<4x2xf32>
    %9 = tpu.concatenate %8, %7, %8 in 1 : vector<4x2xf32>, vector<4x16xf32>, vector<4x2xf32> -> vector<4x20xf32>
    %10 = vector.extract_strided_slice %9 {offsets = [0, 0], sizes = [4, 16], strides = [1, 1]} : vector<4x20xf32> to vector<4x16xf32>
    %11 = vector.extract_strided_slice %9 {offsets = [0, 1], sizes = [4, 16], strides = [1, 1]} : vector<4x20xf32> to vector<4x16xf32>
    %12 = arith.maximumf %10, %11 : vector<4x16xf32>
    %13 = vector.extract_strided_slice %9 {offsets = [0, 2], sizes = [4, 16], strides = [1, 1]} : vector<4x20xf32> to vector<4x16xf32>
    %14 = arith.maximumf %12, %13 : vector<4x16xf32>
    %15 = vector.extract_strided_slice %9 {offsets = [0, 3], sizes = [4, 16], strides = [1, 1]} : vector<4x20xf32> to vector<4x16xf32>
    %16 = arith.maximumf %14, %15 : vector<4x16xf32>
    %17 = vector.extract_strided_slice %9 {offsets = [0, 4], sizes = [4, 16], strides = [1, 1]} : vector<4x20xf32> to vector<4x16xf32>
    %18 = arith.maximumf %16, %17 : vector<4x16xf32>
    %19 = vector.extract_strided_slice %18 {offsets = [0, 0], sizes = [4, 1], strides = [1, 1]} : vector<4x16xf32> to vector<4x1xf32>
    %20 = vector.extract_strided_slice %18 {offsets = [0, 3], sizes = [4, 1], strides = [1, 1]} : vector<4x16xf32> to vector<4x1xf32>
    %21 = vector.extract_strided_slice %18 {offsets = [0, 6], sizes = [4, 1], strides = [1, 1]} : vector<4x16xf32> to vector<4x1xf32>
    %22 = vector.extract_strided_slice %18 {offsets = [0, 9], sizes = [4, 1], strides = [1, 1]} : vector<4x16xf32> to vector<4x1xf32>
    %23 = vector.extract_strided_slice %18 {offsets = [0, 12], sizes = [4, 1], strides = [1, 1]} : vector<4x16xf32> to vector<4x1xf32>
    %24 = vector.extract_strided_slice %18 {offsets = [0, 15], sizes = [4, 1], strides = [1, 1]} : vector<4x16xf32> to vector<4x1xf32>
    %25 = tpu.concatenate %19, %20, %21, %22, %23, %24 in 1 : vector<4x1xf32>, vector<4x1xf32>, vector<4x1xf32>, vector<4x1xf32>, vector<4x1xf32>, vector<4x1xf32> -> vector<4x6xf32>
    %c0_6 = arith.constant 0 : index
    %c0_7 = arith.constant 0 : index
    %c0_8 = arith.constant 0 : index
    %26 = vector.load %arg3[%c0_6, %c0_7, %c0_8] : memref<4x6x6xf32, #tpu.memory_space<vmem>>, vector<4x1x6xf32>
    %27 = vector.shape_cast %26 : vector<4x1x6xf32> to vector<4x6xf32>
    %28 = vector.shape_cast %25 : vector<4x6xf32> to vector<4x1x6xf32>
    tpu.vector_store %arg3[%c0_6, %c0_7, %c0_8], %28 {strides = array<i32>} : memref<4x6x6xf32, #tpu.memory_space<vmem>>, vector<4x1x6xf32>,
    %c0_9 = arith.constant 0 : index
    %c1_10 = arith.constant 1 : index
    %c0_11 = arith.constant 0 : index
    %29 = vector.load %arg1[%c0_9, %c1_10, %c0_11] : memref<4x16x16xf32, #tpu.memory_space<vmem>>, vector<4x1x16xf32>
    %30 = vector.shape_cast %29 : vector<4x1x16xf32> to vector<4x16xf32>
    %c0_12 = arith.constant 0 : index
    %c2_13 = arith.constant 2 : index
    %c0_14 = arith.constant 0 : index
    %31 = vector.load %arg1[%c0_12, %c2_13, %c0_14] : memref<4x16x16xf32, #tpu.memory_space<vmem>>, vector<4x1x16xf32>
    %32 = vector.shape_cast %31 : vector<4x1x16xf32> to vector<4x16xf32>
    %33 = arith.maximumf %30, %32 : vector<4x16xf32>
    %c0_15 = arith.constant 0 : index
    %c3 = arith.constant 3 : index
    %c0_16 = arith.constant 0 : index
    %34 = vector.load %arg1[%c0_15, %c3, %c0_16] : memref<4x16x16xf32, #tpu.memory_space<vmem>>, vector<4x1x16xf32>
    %35 = vector.shape_cast %34 : vector<4x1x16xf32> to vector<4x16xf32>
    %36 = arith.maximumf %33, %35 : vector<4x16xf32>
    %c0_17 = arith.constant 0 : index
    %c4 = arith.constant 4 : index
    %c0_18 = arith.constant 0 : index
    %37 = vector.load %arg1[%c0_17, %c4, %c0_18] : memref<4x16x16xf32, #tpu.memory_space<vmem>>, vector<4x1x16xf32>
    %38 = vector.shape_cast %37 : vector<4x1x16xf32> to vector<4x16xf32>
    %39 = arith.maximumf %36, %38 : vector<4x16xf32>
    %c0_19 = arith.constant 0 : index
    %c5 = arith.constant 5 : index
    %c0_20 = arith.constant 0 : index
    %40 = vector.load %arg1[%c0_19, %c5, %c0_20] : memref<4x16x16xf32, #tpu.memory_space<vmem>>, vector<4x1x16xf32>
    %41 = vector.shape_cast %40 : vector<4x1x16xf32> to vector<4x16xf32>
    %42 = arith.maximumf %39, %41 : vector<4x16xf32>
    %cst_21 = arith.constant 0xFF800000 : f32
    %43 = vector.broadcast %cst_21 : f32 to vector<4x2xf32>
    %44 = tpu.concatenate %43, %42, %43 in 1 : vector<4x2xf32>, vector<4x16xf32>, vector<4x2xf32> -> vector<4x20xf32>
    %45 = vector.extract_strided_slice %44 {offsets = [0, 0], sizes = [4, 16], strides = [1, 1]} : vector<4x20xf32> to vector<4x16xf32>
    %46 = vector.extract_strided_slice %44 {offsets = [0, 1], sizes = [4, 16], strides = [1, 1]} : vector<4x20xf32> to vector<4x16xf32>
    %47 = arith.maximumf %45, %46 : vector<4x16xf32>
    %48 = vector.extract_strided_slice %44 {offsets = [0, 2], sizes = [4, 16], strides = [1, 1]} : vector<4x20xf32> to vector<4x16xf32>
    %49 = arith.maximumf %47, %48 : vector<4x16xf32>
    %50 = vector.extract_strided_slice %44 {offsets = [0, 3], sizes = [4, 16], strides = [1, 1]} : vector<4x20xf32> to vector<4x16xf32>
    %51 = arith.maximumf %49, %50 : vector<4x16xf32>
    %52 = vector.extract_strided_slice %44 {offsets = [0, 4], sizes = [4, 16], strides = [1, 1]} : vector<4x20xf32> to vector<4x16xf32>
    %53 = arith.maximumf %51, %52 : vector<4x16xf32>
    %54 = vector.extract_strided_slice %53 {offsets = [0, 0], sizes = [4, 1], strides = [1, 1]} : vector<4x16xf32> to vector<4x1xf32>
    %55 = vector.extract_strided_slice %53 {offsets = [0, 3], sizes = [4, 1], strides = [1, 1]} : vector<4x16xf32> to vector<4x1xf32>
    %56 = vector.extract_strided_slice %53 {offsets = [0, 6], sizes = [4, 1], strides = [1, 1]} : vector<4x16xf32> to vector<4x1xf32>
    %57 = vector.extract_strided_slice %53 {offsets = [0, 9], sizes = [4, 1], strides = [1, 1]} : vector<4x16xf32> to vector<4x1xf32>
    %58 = vector.extract_strided_slice %53 {offsets = [0, 12], sizes = [4, 1], strides = [1, 1]} : vector<4x16xf32> to vector<4x1xf32>
    %59 = vector.extract_strided_slice %53 {offsets = [0, 15], sizes = [4, 1], strides = [1, 1]} : vector<4x16xf32> to vector<4x1xf32>
    %60 = tpu.concatenate %54, %55, %56, %57, %58, %59 in 1 : vector<4x1xf32>, vector<4x1xf32>, vector<4x1xf32>, vector<4x1xf32>, vector<4x1xf32>, vector<4x1xf32> -> vector<4x6xf32>
    %c0_22 = arith.constant 0 : index
    %c1_23 = arith.constant 1 : index
    %c0_24 = arith.constant 0 : index
    %61 = vector.load %arg3[%c0_22, %c1_23, %c0_24] : memref<4x6x6xf32, #tpu.memory_space<vmem>>, vector<4x1x6xf32>
    %62 = vector.shape_cast %61 : vector<4x1x6xf32> to vector<4x6xf32>
    %63 = vector.shape_cast %60 : vector<4x6xf32> to vector<4x1x6xf32>
    tpu.vector_store %arg3[%c0_22, %c1_23, %c0_24], %63 {strides = array<i32>} : memref<4x6x6xf32, #tpu.memory_space<vmem>>, vector<4x1x6xf32>,
    %c0_25 = arith.constant 0 : index
    %c4_26 = arith.constant 4 : index
    %c0_27 = arith.constant 0 : index
    %64 = vector.load %arg1[%c0_25, %c4_26, %c0_27] : memref<4x16x16xf32, #tpu.memory_space<vmem>>, vector<4x1x16xf32>
    %65 = vector.shape_cast %64 : vector<4x1x16xf32> to vector<4x16xf32>
    %c0_28 = arith.constant 0 : index
    %c5_29 = arith.constant 5 : index
    %c0_30 = arith.constant 0 : index
    %66 = vector.load %arg1[%c0_28, %c5_29, %c0_30] : memref<4x16x16xf32, #tpu.memory_space<vmem>>, vector<4x1x16xf32>
    %67 = vector.shape_cast %66 : vector<4x1x16xf32> to vector<4x16xf32>
    %68 = arith.maximumf %65, %67 : vector<4x16xf32>
    %c0_31 = arith.constant 0 : index
    %c6 = arith.constant 6 : index
    %c0_32 = arith.constant 0 : index
    %69 = vector.load %arg1[%c0_31, %c6, %c0_32] : memref<4x16x16xf32, #tpu.memory_space<vmem>>, vector<4x1x16xf32>
    %70 = vector.shape_cast %69 : vector<4x1x16xf32> to vector<4x16xf32>
    %71 = arith.maximumf %68, %70 : vector<4x16xf32>
    %c0_33 = arith.constant 0 : index
    %c7 = arith.constant 7 : index
    %c0_34 = arith.constant 0 : index
    %72 = vector.load %arg1[%c0_33, %c7, %c0_34] : memref<4x16x16xf32, #tpu.memory_space<vmem>>, vector<4x1x16xf32>
    %73 = vector.shape_cast %72 : vector<4x1x16xf32> to vector<4x16xf32>
    %74 = arith.maximumf %71, %73 : vector<4x16xf32>
    %c0_35 = arith.constant 0 : index
    %c8 = arith.constant 8 : index
    %c0_36 = arith.constant 0 : index
    %75 = vector.load %arg1[%c0_35, %c8, %c0_36] : memref<4x16x16xf32, #tpu.memory_space<vmem>>, vector<4x1x16xf32>
    %76 = vector.shape_cast %75 : vector<4x1x16xf32> to vector<4x16xf32>
    %77 = arith.maximumf %74, %76 : vector<4x16xf32>
    %cst_37 = arith.constant 0xFF800000 : f32
    %78 = vector.broadcast %cst_37 : f32 to vector<4x2xf32>
    %79 = tpu.concatenate %78, %77, %78 in 1 : vector<4x2xf32>, vector<4x16xf32>, vector<4x2xf32> -> vector<4x20xf32>
    %80 = vector.extract_strided_slice %79 {offsets = [0, 0], sizes = [4, 16], strides = [1, 1]} : vector<4x20xf32> to vector<4x16xf32>
    %81 = vector.extract_strided_slice %79 {offsets = [0, 1], sizes = [4, 16], strides = [1, 1]} : vector<4x20xf32> to vector<4x16xf32>
    %82 = arith.maximumf %80, %81 : vector<4x16xf32>
    %83 = vector.extract_strided_slice %79 {offsets = [0, 2], sizes = [4, 16], strides = [1, 1]} : vector<4x20xf32> to vector<4x16xf32>
    %84 = arith.maximumf %82, %83 : vector<4x16xf32>
    %85 = vector.extract_strided_slice %79 {offsets = [0, 3], sizes = [4, 16], strides = [1, 1]} : vector<4x20xf32> to vector<4x16xf32>
    %86 = arith.maximumf %84, %85 : vector<4x16xf32>
    %87 = vector.extract_strided_slice %79 {offsets = [0, 4], sizes = [4, 16], strides = [1, 1]} : vector<4x20xf32> to vector<4x16xf32>
    %88 = arith.maximumf %86, %87 : vector<4x16xf32>
    %89 = vector.extract_strided_slice %88 {offsets = [0, 0], sizes = [4, 1], strides = [1, 1]} : vector<4x16xf32> to vector<4x1xf32>
    %90 = vector.extract_strided_slice %88 {offsets = [0, 3], sizes = [4, 1], strides = [1, 1]} : vector<4x16xf32> to vector<4x1xf32>
    %91 = vector.extract_strided_slice %88 {offsets = [0, 6], sizes = [4, 1], strides = [1, 1]} : vector<4x16xf32> to vector<4x1xf32>
    %92 = vector.extract_strided_slice %88 {offsets = [0, 9], sizes = [4, 1], strides = [1, 1]} : vector<4x16xf32> to vector<4x1xf32>
    %93 = vector.extract_strided_slice %88 {offsets = [0, 12], sizes = [4, 1], strides = [1, 1]} : vector<4x16xf32> to vector<4x1xf32>
    %94 = vector.extract_strided_slice %88 {offsets = [0, 15], sizes = [4, 1], strides = [1, 1]} : vector<4x16xf32> to vector<4x1xf32>
    %95 = tpu.concatenate %89, %90, %91, %92, %93, %94 in 1 : vector<4x1xf32>, vector<4x1xf32>, vector<4x1xf32>, vector<4x1xf32>, vector<4x1xf32>, vector<4x1xf32> -> vector<4x6xf32>
    %c0_38 = arith.constant 0 : index
    %c2_39 = arith.constant 2 : index
    %c0_40 = arith.constant 0 : index
    %96 = vector.load %arg3[%c0_38, %c2_39, %c0_40] : memref<4x6x6xf32, #tpu.memory_space<vmem>>, vector<4x1x6xf32>
    %97 = vector.shape_cast %96 : vector<4x1x6xf32> to vector<4x6xf32>
    %98 = vector.shape_cast %95 : vector<4x6xf32> to vector<4x1x6xf32>
    tpu.vector_store %arg3[%c0_38, %c2_39, %c0_40], %98 {strides = array<i32>} : memref<4x6x6xf32, #tpu.memory_space<vmem>>, vector<4x1x6xf32>,
    %c0_41 = arith.constant 0 : index
    %c7_42 = arith.constant 7 : index
    %c0_43 = arith.constant 0 : index
    %99 = vector.load %arg1[%c0_41, %c7_42, %c0_43] : memref<4x16x16xf32, #tpu.memory_space<vmem>>, vector<4x1x16xf32>
    %100 = vector.shape_cast %99 : vector<4x1x16xf32> to vector<4x16xf32>
    %c0_44 = arith.constant 0 : index
    %c8_45 = arith.constant 8 : index
    %c0_46 = arith.constant 0 : index
    %101 = vector.load %arg1[%c0_44, %c8_45, %c0_46] : memref<4x16x16xf32, #tpu.memory_space<vmem>>, vector<4x1x16xf32>
    %102 = vector.shape_cast %101 : vector<4x1x16xf32> to vector<4x16xf32>
    %103 = arith.maximumf %100, %102 : vector<4x16xf32>
    %c0_47 = arith.constant 0 : index
    %c9 = arith.constant 9 : index
    %c0_48 = arith.constant 0 : index
    %104 = vector.load %arg1[%c0_47, %c9, %c0_48] : memref<4x16x16xf32, #tpu.memory_space<vmem>>, vector<4x1x16xf32>
    %105 = vector.shape_cast %104 : vector<4x1x16xf32> to vector<4x16xf32>
    %106 = arith.maximumf %103, %105 : vector<4x16xf32>
    %c0_49 = arith.constant 0 : index
    %c10 = arith.constant 10 : index
    %c0_50 = arith.constant 0 : index
    %107 = vector.load %arg1[%c0_49, %c10, %c0_50] : memref<4x16x16xf32, #tpu.memory_space<vmem>>, vector<4x1x16xf32>
    %108 = vector.shape_cast %107 : vector<4x1x16xf32> to vector<4x16xf32>
    %109 = arith.maximumf %106, %108 : vector<4x16xf32>
    %c0_51 = arith.constant 0 : index
    %c11 = arith.constant 11 : index
    %c0_52 = arith.constant 0 : index
    %110 = vector.load %arg1[%c0_51, %c11, %c0_52] : memref<4x16x16xf32, #tpu.memory_space<vmem>>, vector<4x1x16xf32>
    %111 = vector.shape_cast %110 : vector<4x1x16xf32> to vector<4x16xf32>
    %112 = arith.maximumf %109, %111 : vector<4x16xf32>
    %cst_53 = arith.constant 0xFF800000 : f32
    %113 = vector.broadcast %cst_53 : f32 to vector<4x2xf32>
    %114 = tpu.concatenate %113, %112, %113 in 1 : vector<4x2xf32>, vector<4x16xf32>, vector<4x2xf32> -> vector<4x20xf32>
    %115 = vector.extract_strided_slice %114 {offsets = [0, 0], sizes = [4, 16], strides = [1, 1]} : vector<4x20xf32> to vector<4x16xf32>
    %116 = vector.extract_strided_slice %114 {offsets = [0, 1], sizes = [4, 16], strides = [1, 1]} : vector<4x20xf32> to vector<4x16xf32>
    %117 = arith.maximumf %115, %116 : vector<4x16xf32>
    %118 = vector.extract_strided_slice %114 {offsets = [0, 2], sizes = [4, 16], strides = [1, 1]} : vector<4x20xf32> to vector<4x16xf32>
    %119 = arith.maximumf %117, %118 : vector<4x16xf32>
    %120 = vector.extract_strided_slice %114 {offsets = [0, 3], sizes = [4, 16], strides = [1, 1]} : vector<4x20xf32> to vector<4x16xf32>
    %121 = arith.maximumf %119, %120 : vector<4x16xf32>
    %122 = vector.extract_strided_slice %114 {offsets = [0, 4], sizes = [4, 16], strides = [1, 1]} : vector<4x20xf32> to vector<4x16xf32>
    %123 = arith.maximumf %121, %122 : vector<4x16xf32>
    %124 = vector.extract_strided_slice %123 {offsets = [0, 0], sizes = [4, 1], strides = [1, 1]} : vector<4x16xf32> to vector<4x1xf32>
    %125 = vector.extract_strided_slice %123 {offsets = [0, 3], sizes = [4, 1], strides = [1, 1]} : vector<4x16xf32> to vector<4x1xf32>
    %126 = vector.extract_strided_slice %123 {offsets = [0, 6], sizes = [4, 1], strides = [1, 1]} : vector<4x16xf32> to vector<4x1xf32>
    %127 = vector.extract_strided_slice %123 {offsets = [0, 9], sizes = [4, 1], strides = [1, 1]} : vector<4x16xf32> to vector<4x1xf32>
    %128 = vector.extract_strided_slice %123 {offsets = [0, 12], sizes = [4, 1], strides = [1, 1]} : vector<4x16xf32> to vector<4x1xf32>
    %129 = vector.extract_strided_slice %123 {offsets = [0, 15], sizes = [4, 1], strides = [1, 1]} : vector<4x16xf32> to vector<4x1xf32>
    %130 = tpu.concatenate %124, %125, %126, %127, %128, %129 in 1 : vector<4x1xf32>, vector<4x1xf32>, vector<4x1xf32>, vector<4x1xf32>, vector<4x1xf32>, vector<4x1xf32> -> vector<4x6xf32>
    %c0_54 = arith.constant 0 : index
    %c3_55 = arith.constant 3 : index
    %c0_56 = arith.constant 0 : index
    %131 = vector.load %arg3[%c0_54, %c3_55, %c0_56] : memref<4x6x6xf32, #tpu.memory_space<vmem>>, vector<4x1x6xf32>
    %132 = vector.shape_cast %131 : vector<4x1x6xf32> to vector<4x6xf32>
    %133 = vector.shape_cast %130 : vector<4x6xf32> to vector<4x1x6xf32>
    tpu.vector_store %arg3[%c0_54, %c3_55, %c0_56], %133 {strides = array<i32>} : memref<4x6x6xf32, #tpu.memory_space<vmem>>, vector<4x1x6xf32>,
    %c0_57 = arith.constant 0 : index
    %c10_58 = arith.constant 10 : index
    %c0_59 = arith.constant 0 : index
    %134 = vector.load %arg1[%c0_57, %c10_58, %c0_59] : memref<4x16x16xf32, #tpu.memory_space<vmem>>, vector<4x1x16xf32>
    %135 = vector.shape_cast %134 : vector<4x1x16xf32> to vector<4x16xf32>
    %c0_60 = arith.constant 0 : index
    %c11_61 = arith.constant 11 : index
    %c0_62 = arith.constant 0 : index
    %136 = vector.load %arg1[%c0_60, %c11_61, %c0_62] : memref<4x16x16xf32, #tpu.memory_space<vmem>>, vector<4x1x16xf32>
    %137 = vector.shape_cast %136 : vector<4x1x16xf32> to vector<4x16xf32>
    %138 = arith.maximumf %135, %137 : vector<4x16xf32>
    %c0_63 = arith.constant 0 : index
    %c12 = arith.constant 12 : index
    %c0_64 = arith.constant 0 : index
    %139 = vector.load %arg1[%c0_63, %c12, %c0_64] : memref<4x16x16xf32, #tpu.memory_space<vmem>>, vector<4x1x16xf32>
    %140 = vector.shape_cast %139 : vector<4x1x16xf32> to vector<4x16xf32>
    %141 = arith.maximumf %138, %140 : vector<4x16xf32>
    %c0_65 = arith.constant 0 : index
    %c13 = arith.constant 13 : index
    %c0_66 = arith.constant 0 : index
    %142 = vector.load %arg1[%c0_65, %c13, %c0_66] : memref<4x16x16xf32, #tpu.memory_space<vmem>>, vector<4x1x16xf32>
    %143 = vector.shape_cast %142 : vector<4x1x16xf32> to vector<4x16xf32>
    %144 = arith.maximumf %141, %143 : vector<4x16xf32>
    %c0_67 = arith.constant 0 : index
    %c14 = arith.constant 14 : index
    %c0_68 = arith.constant 0 : index
    %145 = vector.load %arg1[%c0_67, %c14, %c0_68] : memref<4x16x16xf32, #tpu.memory_space<vmem>>, vector<4x1x16xf32>
    %146 = vector.shape_cast %145 : vector<4x1x16xf32> to vector<4x16xf32>
    %147 = arith.maximumf %144, %146 : vector<4x16xf32>
    %cst_69 = arith.constant 0xFF800000 : f32
    %148 = vector.broadcast %cst_69 : f32 to vector<4x2xf32>
    %149 = tpu.concatenate %148, %147, %148 in 1 : vector<4x2xf32>, vector<4x16xf32>, vector<4x2xf32> -> vector<4x20xf32>
    %150 = vector.extract_strided_slice %149 {offsets = [0, 0], sizes = [4, 16], strides = [1, 1]} : vector<4x20xf32> to vector<4x16xf32>
    %151 = vector.extract_strided_slice %149 {offsets = [0, 1], sizes = [4, 16], strides = [1, 1]} : vector<4x20xf32> to vector<4x16xf32>
    %152 = arith.maximumf %150, %151 : vector<4x16xf32>
    %153 = vector.extract_strided_slice %149 {offsets = [0, 2], sizes = [4, 16], strides = [1, 1]} : vector<4x20xf32> to vector<4x16xf32>
    %154 = arith.maximumf %152, %153 : vector<4x16xf32>
    %155 = vector.extract_strided_slice %149 {offsets = [0, 3], sizes = [4, 16], strides = [1, 1]} : vector<4x20xf32> to vector<4x16xf32>
    %156 = arith.maximumf %154, %155 : vector<4x16xf32>
    %157 = vector.extract_strided_slice %149 {offsets = [0, 4], sizes = [4, 16], strides = [1, 1]} : vector<4x20xf32> to vector<4x16xf32>
    %158 = arith.maximumf %156, %157 : vector<4x16xf32>
    %159 = vector.extract_strided_slice %158 {offsets = [0, 0], sizes = [4, 1], strides = [1, 1]} : vector<4x16xf32> to vector<4x1xf32>
    %160 = vector.extract_strided_slice %158 {offsets = [0, 3], sizes = [4, 1], strides = [1, 1]} : vector<4x16xf32> to vector<4x1xf32>
    %161 = vector.extract_strided_slice %158 {offsets = [0, 6], sizes = [4, 1], strides = [1, 1]} : vector<4x16xf32> to vector<4x1xf32>
    %162 = vector.extract_strided_slice %158 {offsets = [0, 9], sizes = [4, 1], strides = [1, 1]} : vector<4x16xf32> to vector<4x1xf32>
    %163 = vector.extract_strided_slice %158 {offsets = [0, 12], sizes = [4, 1], strides = [1, 1]} : vector<4x16xf32> to vector<4x1xf32>
    %164 = vector.extract_strided_slice %158 {offsets = [0, 15], sizes = [4, 1], strides = [1, 1]} : vector<4x16xf32> to vector<4x1xf32>
    %165 = tpu.concatenate %159, %160, %161, %162, %163, %164 in 1 : vector<4x1xf32>, vector<4x1xf32>, vector<4x1xf32>, vector<4x1xf32>, vector<4x1xf32>, vector<4x1xf32> -> vector<4x6xf32>
    %c0_70 = arith.constant 0 : index
    %c4_71 = arith.constant 4 : index
    %c0_72 = arith.constant 0 : index
    %166 = vector.load %arg3[%c0_70, %c4_71, %c0_72] : memref<4x6x6xf32, #tpu.memory_space<vmem>>, vector<4x1x6xf32>
    %167 = vector.shape_cast %166 : vector<4x1x6xf32> to vector<4x6xf32>
    %168 = vector.shape_cast %165 : vector<4x6xf32> to vector<4x1x6xf32>
    tpu.vector_store %arg3[%c0_70, %c4_71, %c0_72], %168 {strides = array<i32>} : memref<4x6x6xf32, #tpu.memory_space<vmem>>, vector<4x1x6xf32>,
    %c0_73 = arith.constant 0 : index
    %c13_74 = arith.constant 13 : index
    %c0_75 = arith.constant 0 : index
    %169 = vector.load %arg1[%c0_73, %c13_74, %c0_75] : memref<4x16x16xf32, #tpu.memory_space<vmem>>, vector<4x1x16xf32>
    %170 = vector.shape_cast %169 : vector<4x1x16xf32> to vector<4x16xf32>
    %c0_76 = arith.constant 0 : index
    %c14_77 = arith.constant 14 : index
    %c0_78 = arith.constant 0 : index
    %171 = vector.load %arg1[%c0_76, %c14_77, %c0_78] : memref<4x16x16xf32, #tpu.memory_space<vmem>>, vector<4x1x16xf32>
    %172 = vector.shape_cast %171 : vector<4x1x16xf32> to vector<4x16xf32>
    %173 = arith.maximumf %170, %172 : vector<4x16xf32>
    %c0_79 = arith.constant 0 : index
    %c15 = arith.constant 15 : index
    %c0_80 = arith.constant 0 : index
    %174 = vector.load %arg1[%c0_79, %c15, %c0_80] : memref<4x16x16xf32, #tpu.memory_space<vmem>>, vector<4x1x16xf32>
    %175 = vector.shape_cast %174 : vector<4x1x16xf32> to vector<4x16xf32>
    %176 = arith.maximumf %173, %175 : vector<4x16xf32>
    %cst_81 = arith.constant 0xFF800000 : f32
    %177 = vector.broadcast %cst_81 : f32 to vector<4x2xf32>
    %178 = tpu.concatenate %177, %176, %177 in 1 : vector<4x2xf32>, vector<4x16xf32>, vector<4x2xf32> -> vector<4x20xf32>
    %179 = vector.extract_strided_slice %178 {offsets = [0, 0], sizes = [4, 16], strides = [1, 1]} : vector<4x20xf32> to vector<4x16xf32>
    %180 = vector.extract_strided_slice %178 {offsets = [0, 1], sizes = [4, 16], strides = [1, 1]} : vector<4x20xf32> to vector<4x16xf32>
    %181 = arith.maximumf %179, %180 : vector<4x16xf32>
    %182 = vector.extract_strided_slice %178 {offsets = [0, 2], sizes = [4, 16], strides = [1, 1]} : vector<4x20xf32> to vector<4x16xf32>
    %183 = arith.maximumf %181, %182 : vector<4x16xf32>
    %184 = vector.extract_strided_slice %178 {offsets = [0, 3], sizes = [4, 16], strides = [1, 1]} : vector<4x20xf32> to vector<4x16xf32>
    %185 = arith.maximumf %183, %184 : vector<4x16xf32>
    %186 = vector.extract_strided_slice %178 {offsets = [0, 4], sizes = [4, 16], strides = [1, 1]} : vector<4x20xf32> to vector<4x16xf32>
    %187 = arith.maximumf %185, %186 : vector<4x16xf32>
    %188 = vector.extract_strided_slice %187 {offsets = [0, 0], sizes = [4, 1], strides = [1, 1]} : vector<4x16xf32> to vector<4x1xf32>
    %189 = vector.extract_strided_slice %187 {offsets = [0, 3], sizes = [4, 1], strides = [1, 1]} : vector<4x16xf32> to vector<4x1xf32>
    %190 = vector.extract_strided_slice %187 {offsets = [0, 6], sizes = [4, 1], strides = [1, 1]} : vector<4x16xf32> to vector<4x1xf32>
    %191 = vector.extract_strided_slice %187 {offsets = [0, 9], sizes = [4, 1], strides = [1, 1]} : vector<4x16xf32> to vector<4x1xf32>
    %192 = vector.extract_strided_slice %187 {offsets = [0, 12], sizes = [4, 1], strides = [1, 1]} : vector<4x16xf32> to vector<4x1xf32>
    %193 = vector.extract_strided_slice %187 {offsets = [0, 15], sizes = [4, 1], strides = [1, 1]} : vector<4x16xf32> to vector<4x1xf32>
    %194 = tpu.concatenate %188, %189, %190, %191, %192, %193 in 1 : vector<4x1xf32>, vector<4x1xf32>, vector<4x1xf32>, vector<4x1xf32>, vector<4x1xf32>, vector<4x1xf32> -> vector<4x6xf32>
    %c0_82 = arith.constant 0 : index
    %c5_83 = arith.constant 5 : index
    %c0_84 = arith.constant 0 : index
    %195 = vector.load %arg3[%c0_82, %c5_83, %c0_84] : memref<4x6x6xf32, #tpu.memory_space<vmem>>, vector<4x1x6xf32>
    %196 = vector.shape_cast %195 : vector<4x1x6xf32> to vector<4x6xf32>
    %197 = vector.shape_cast %194 : vector<4x6xf32> to vector<4x1x6xf32>
    tpu.vector_store %arg3[%c0_82, %c5_83, %c0_84], %197 {strides = array<i32>} : memref<4x6x6xf32, #tpu.memory_space<vmem>>, vector<4x1x6xf32>,
    %c0_85 = arith.constant 0 : index
    %c0_86 = arith.constant 0 : index
    %c0_87 = arith.constant 0 : index
    %198 = vector.load %arg3[%c0_85, %c0_86, %c0_87] : memref<4x6x6xf32, #tpu.memory_space<vmem>>, vector<4x1x6xf32>
    %199 = vector.shape_cast %198 : vector<4x1x6xf32> to vector<4x6xf32>
    %c0_88 = arith.constant 0 : index
    %c1_89 = arith.constant 1 : index
    %c0_90 = arith.constant 0 : index
    %200 = vector.load %arg3[%c0_88, %c1_89, %c0_90] : memref<4x6x6xf32, #tpu.memory_space<vmem>>, vector<4x1x6xf32>
    %201 = vector.shape_cast %200 : vector<4x1x6xf32> to vector<4x6xf32>
    %202 = arith.maximumf %199, %201 : vector<4x6xf32>
    %c0_91 = arith.constant 0 : index
    %c2_92 = arith.constant 2 : index
    %c0_93 = arith.constant 0 : index
    %203 = vector.load %arg3[%c0_91, %c2_92, %c0_93] : memref<4x6x6xf32, #tpu.memory_space<vmem>>, vector<4x1x6xf32>
    %204 = vector.shape_cast %203 : vector<4x1x6xf32> to vector<4x6xf32>
    %205 = arith.maximumf %202, %204 : vector<4x6xf32>
    %cst_94 = arith.constant 0xFF800000 : f32
    %206 = vector.broadcast %cst_94 : f32 to vector<4x2xf32>
    %207 = tpu.concatenate %206, %205, %206 in 1 : vector<4x2xf32>, vector<4x6xf32>, vector<4x2xf32> -> vector<4x10xf32>
    %208 = vector.extract_strided_slice %207 {offsets = [0, 0], sizes = [4, 4], strides = [1, 1]} : vector<4x10xf32> to vector<4x4xf32>
    %209 = vector.extract_strided_slice %207 {offsets = [0, 1], sizes = [4, 4], strides = [1, 1]} : vector<4x10xf32> to vector<4x4xf32>
    %210 = arith.maximumf %208, %209 : vector<4x4xf32>
    %211 = vector.extract_strided_slice %207 {offsets = [0, 2], sizes = [4, 4], strides = [1, 1]} : vector<4x10xf32> to vector<4x4xf32>
    %212 = arith.maximumf %210, %211 : vector<4x4xf32>
    %213 = vector.extract_strided_slice %207 {offsets = [0, 3], sizes = [4, 4], strides = [1, 1]} : vector<4x10xf32> to vector<4x4xf32>
    %214 = arith.maximumf %212, %213 : vector<4x4xf32>
    %215 = vector.extract_strided_slice %207 {offsets = [0, 4], sizes = [4, 4], strides = [1, 1]} : vector<4x10xf32> to vector<4x4xf32>
    %216 = arith.maximumf %214, %215 : vector<4x4xf32>
    %217 = vector.extract_strided_slice %216 {offsets = [0, 0], sizes = [4, 1], strides = [1, 1]} : vector<4x4xf32> to vector<4x1xf32>
    %218 = vector.extract_strided_slice %216 {offsets = [0, 3], sizes = [4, 1], strides = [1, 1]} : vector<4x4xf32> to vector<4x1xf32>
    %219 = tpu.concatenate %217, %218 in 1 : vector<4x1xf32>, vector<4x1xf32> -> vector<4x2xf32>
    %cst_95 = arith.constant 3.658010e-01 : f32
    %220 = vector.broadcast %cst_95 : f32 to vector<4x2xf32>
    %221 = arith.maximumf %219, %220 : vector<4x2xf32>
    %cst_96 = arith.constant 1.557900e+00 : f32
    %222 = vector.broadcast %cst_96 : f32 to vector<4x2xf32>
    %223 = arith.minimumf %221, %222 : vector<4x2xf32>
    %cst_97 = arith.constant 2.000000e+00 : f32
    %224 = vector.broadcast %cst_97 : f32 to vector<4x2xf32>
    %225 = arith.mulf %224, %223 : vector<4x2xf32>
    %c0_98 = arith.constant 0 : index
    %c0_99 = arith.constant 0 : index
    %c0_100 = arith.constant 0 : index
    %226 = vector.load %arg2[%c0_98, %c0_99, %c0_100] : memref<4x2x2xf32, #tpu.memory_space<vmem>>, vector<4x1x2xf32>
    %227 = vector.shape_cast %226 : vector<4x1x2xf32> to vector<4x2xf32>
    %228 = vector.shape_cast %225 : vector<4x2xf32> to vector<4x1x2xf32>
    tpu.vector_store %arg2[%c0_98, %c0_99, %c0_100], %228 {strides = array<i32>} : memref<4x2x2xf32, #tpu.memory_space<vmem>>, vector<4x1x2xf32>,
    %c0_101 = arith.constant 0 : index
    %c1_102 = arith.constant 1 : index
    %c0_103 = arith.constant 0 : index
    %229 = vector.load %arg3[%c0_101, %c1_102, %c0_103] : memref<4x6x6xf32, #tpu.memory_space<vmem>>, vector<4x1x6xf32>
    %230 = vector.shape_cast %229 : vector<4x1x6xf32> to vector<4x6xf32>
    %c0_104 = arith.constant 0 : index
    %c2_105 = arith.constant 2 : index
    %c0_106 = arith.constant 0 : index
    %231 = vector.load %arg3[%c0_104, %c2_105, %c0_106] : memref<4x6x6xf32, #tpu.memory_space<vmem>>, vector<4x1x6xf32>
    %232 = vector.shape_cast %231 : vector<4x1x6xf32> to vector<4x6xf32>
    %233 = arith.maximumf %230, %232 : vector<4x6xf32>
    %c0_107 = arith.constant 0 : index
    %c3_108 = arith.constant 3 : index
    %c0_109 = arith.constant 0 : index
    %234 = vector.load %arg3[%c0_107, %c3_108, %c0_109] : memref<4x6x6xf32, #tpu.memory_space<vmem>>, vector<4x1x6xf32>
    %235 = vector.shape_cast %234 : vector<4x1x6xf32> to vector<4x6xf32>
    %236 = arith.maximumf %233, %235 : vector<4x6xf32>
    %c0_110 = arith.constant 0 : index
    %c4_111 = arith.constant 4 : index
    %c0_112 = arith.constant 0 : index
    %237 = vector.load %arg3[%c0_110, %c4_111, %c0_112] : memref<4x6x6xf32, #tpu.memory_space<vmem>>, vector<4x1x6xf32>
    %238 = vector.shape_cast %237 : vector<4x1x6xf32> to vector<4x6xf32>
    %239 = arith.maximumf %236, %238 : vector<4x6xf32>
    %c0_113 = arith.constant 0 : index
    %c5_114 = arith.constant 5 : index
    %c0_115 = arith.constant 0 : index
    %240 = vector.load %arg3[%c0_113, %c5_114, %c0_115] : memref<4x6x6xf32, #tpu.memory_space<vmem>>, vector<4x1x6xf32>
    %241 = vector.shape_cast %240 : vector<4x1x6xf32> to vector<4x6xf32>
    %242 = arith.maximumf %239, %241 : vector<4x6xf32>
    %cst_116 = arith.constant 0xFF800000 : f32
    %243 = vector.broadcast %cst_116 : f32 to vector<4x2xf32>
    %244 = tpu.concatenate %243, %242, %243 in 1 : vector<4x2xf32>, vector<4x6xf32>, vector<4x2xf32> -> vector<4x10xf32>
    %245 = vector.extract_strided_slice %244 {offsets = [0, 0], sizes = [4, 4], strides = [1, 1]} : vector<4x10xf32> to vector<4x4xf32>
    %246 = vector.extract_strided_slice %244 {offsets = [0, 1], sizes = [4, 4], strides = [1, 1]} : vector<4x10xf32> to vector<4x4xf32>
    %247 = arith.maximumf %245, %246 : vector<4x4xf32>
    %248 = vector.extract_strided_slice %244 {offsets = [0, 2], sizes = [4, 4], strides = [1, 1]} : vector<4x10xf32> to vector<4x4xf32>
    %249 = arith.maximumf %247, %248 : vector<4x4xf32>
    %250 = vector.extract_strided_slice %244 {offsets = [0, 3], sizes = [4, 4], strides = [1, 1]} : vector<4x10xf32> to vector<4x4xf32>
    %251 = arith.maximumf %249, %250 : vector<4x4xf32>
    %252 = vector.extract_strided_slice %244 {offsets = [0, 4], sizes = [4, 4], strides = [1, 1]} : vector<4x10xf32> to vector<4x4xf32>
    %253 = arith.maximumf %251, %252 : vector<4x4xf32>
    %254 = vector.extract_strided_slice %253 {offsets = [0, 0], sizes = [4, 1], strides = [1, 1]} : vector<4x4xf32> to vector<4x1xf32>
    %255 = vector.extract_strided_slice %253 {offsets = [0, 3], sizes = [4, 1], strides = [1, 1]} : vector<4x4xf32> to vector<4x1xf32>
    %256 = tpu.concatenate %254, %255 in 1 : vector<4x1xf32>, vector<4x1xf32> -> vector<4x2xf32>
    %cst_117 = arith.constant 3.658010e-01 : f32
    %257 = vector.broadcast %cst_117 : f32 to vector<4x2xf32>
    %258 = arith.maximumf %256, %257 : vector<4x2xf32>
    %cst_118 = arith.constant 1.557900e+00 : f32
    %259 = vector.broadcast %cst_118 : f32 to vector<4x2xf32>
    %260 = arith.minimumf %258, %259 : vector<4x2xf32>
    %cst_119 = arith.constant 2.000000e+00 : f32
    %261 = vector.broadcast %cst_119 : f32 to vector<4x2xf32>
    %262 = arith.mulf %261, %260 : vector<4x2xf32>
    %c0_120 = arith.constant 0 : index
    %c1_121 = arith.constant 1 : index
    %c0_122 = arith.constant 0 : index
    %263 = vector.load %arg2[%c0_120, %c1_121, %c0_122] : memref<4x2x2xf32, #tpu.memory_space<vmem>>, vector<4x1x2xf32>
    %264 = vector.shape_cast %263 : vector<4x1x2xf32> to vector<4x2xf32>
    %265 = vector.shape_cast %262 : vector<4x2xf32> to vector<4x1x2xf32>
    tpu.vector_store %arg2[%c0_120, %c1_121, %c0_122], %265 {strides = array<i32>} : memref<4x2x2xf32, #tpu.memory_space<vmem>>, vector<4x1x2xf32>,
    return
  }
  func.func @transform_0(%arg0: i32) -> (i32, i32, i32) {
    %c0_i32 = arith.constant 0 : i32
    %c0_i32_0 = arith.constant 0 : i32
    %c0_i32_1 = arith.constant 0 : i32
    return %arg0, %c0_i32, %c0_i32_0 : i32, i32, i32
  }
  func.func @transform_1(%arg0: i32) -> (i32, i32, i32) {
    %c0_i32 = arith.constant 0 : i32
    %c0_i32_0 = arith.constant 0 : i32
    %c0_i32_1 = arith.constant 0 : i32
    return %arg0, %c0_i32, %c0_i32_0 : i32, i32, i32
  }
}

</mosaic_0001>

<llo_original>
// kernel: tpu_custom_call.1
$region0: #{tpu_custom_call.1}
  #allocation0 [shape = 'u32[]', space=smem, size = 0x4, offset = 0x4, fixed_abs, tag = 'smem constant byte address 0x4 - core index']
  #allocation1 [shape = 'u32[144,128]{1,0:T(1,128)}', space=vmem, size = 0x12000, scoped, tag = 'internal scratch']
  #allocation2 [shape = 'f32[4,6,6]{2,1,0:T(8,128)}', space=vmem, size = 0x4000, scoped, tag = 'scratch operand']
  %s0 = inlined_call_operand.hbm [shape: f32[8,16,16], index: 0, kind: input, shape index: {}]
  %s1 = inlined_call_operand.vmem [shape: f32[8,2,2], index: 1, kind: output, shape index: {}]
  %s2 = sld [smem:[#allocation0]]
  $region41: #{tpu_custom_call.1} parent=0
    _
  %s4 = ssub.s32 1, %s2
  %s5 = scalar_select 0, %s4, %s2
  $region1: #{tpu_custom_call.1} parent=0
    #allocation3 [shape = 'u8[65536]{0}', space=vmem, size = 0x10000, scoped, tag = 'input window, operand 0']
    #allocation4 [shape = 's32[2]{0}', space=sflag, size = 0x8, scoped, tag = 'scoped memory for tpu_custom_call.1']
    %6 = vsyncpa [#allocation4], 0
    %s7 = scalar_lea.sflag [#allocation4], 1
    %8 = vsyncpa %s7, 0
    loop: start=0, step=1, limit=4
    $region2: #{tpu_custom_call.1} parent=1 // loop_pre_header
      _
    $region3: #{tpu_custom_call.1} parent=1 // loop_header
      %s10 = sphi 0, %s14
      %p11 = scmp.ge.s32.totalorder %s10, 4
      %s20 = sphi 0, %s22
      %s23 = sphi 0, %s20
      %s24 = sphi 0, %s23
      %s40 = sphi 0, %s24
      %s46 = sphi 0, %s48
      %s49 = sphi 0, %s46
      %s50 = sphi 0, %s49
      %s66 = sphi 0, %s50
    $region4: #{tpu_custom_call.1} parent=1 // loop_header_branch
      %13 = sbr.rel (%p11) target = $region8
    $region5: #{tpu_custom_call.1} parent=1 // loop_body
      %s15 = ssub.s32 %s10, 1
      %s16 = ssub.s32 %s10, 2
      %s17 = sadd.s32 %s10, 1
      %s18 = ssub.s32 %s10, %s17
      %p19 = scmp.eq.s32.totalorder %s18, 0
      %s21 = sadd.s32 %s20, 1
      %s22 = scalar_select %p19, %s20, %s21
      %p25 = pneg %p19
      %p26 = scmp.eq.s32.totalorder %s10, 1
      %p27 = por %p25, %p26
      %p28 = scmp.ne.s32.totalorder %s20, %s23
      %p29 = scmp.eq.s32.totalorder %s10, 0
      %p30 = por %p28, %p29
      %p31 = scmp.ne.s32.totalorder %s20, %s23
      %p32 = scmp.eq.s32.totalorder %s15, 1
      %p33 = por %p31, %p32
      %p34 = scmp.ne.s32.totalorder %s23, %s24
      %p35 = scmp.eq.s32.totalorder %s15, 0
      %p36 = por %p34, %p35
      %p37 = scmp.ne.s32.totalorder %s23, %s24
      %p38 = scmp.eq.s32.totalorder %s16, 1
      %p39 = por %p37, %p38
      %p41 = scmp.ne.s32.totalorder %s24, %s40
      %p42 = scmp.eq.s32.totalorder %s16, 0
      %p43 = por %p41, %p42
      %s44 = ssub.s32 %s10, %s17
      %p45 = scmp.eq.s32.totalorder %s44, 0
      %s47 = sadd.s32 %s46, 1
      %s48 = scalar_select %p45, %s46, %s47
      %p51 = pneg %p45
      %p52 = scmp.eq.s32.totalorder %s10, 1
      %p53 = por %p51, %p52
      %p54 = scmp.ne.s32.totalorder %s46, %s49
      %p55 = scmp.eq.s32.totalorder %s10, 0
      %p56 = por %p54, %p55
      %p57 = scmp.ne.s32.totalorder %s46, %s49
      %p58 = scmp.eq.s32.totalorder %s15, 1
      %p59 = por %p57, %p58
      %p60 = scmp.ne.s32.totalorder %s49, %s50
      %p61 = scmp.eq.s32.totalorder %s15, 0
      %p62 = por %p60, %p61
      %p63 = scmp.ne.s32.totalorder %s49, %s50
      %p64 = scmp.eq.s32.totalorder %s16, 1
      %p65 = por %p63, %p64
      %p67 = scmp.ne.s32.totalorder %s50, %s66
      %p68 = scmp.eq.s32.totalorder %s16, 0
      %p69 = por %p67, %p68
      %p70 = scmp.le.s32.totalorder 1, %s10
      %p71 = scmp.lt.s32.totalorder %s10, 3
      %p72 = pnand %p70, %p71
      %p73 = pneg %p72
      // Predicated region
      $region9: #{tpu_custom_call.1} parent=5 // pred_check
        _
      $region10: #{tpu_custom_call.1} parent=5 // pred_check_branch
        %75 = sbr.rel (%p72) target = $region12
      $region11: #{tpu_custom_call.1} parent=5 // pred_region
        %s76 = ssub.s32 %s10, 1
      $region12: #{tpu_custom_call.1} parent=5 // pred_fallthru
        _
      %p77 = scmp.lt.s32.totalorder %s10, 2
      // Predicated region
      $region13: #{tpu_custom_call.1} parent=5 // pred_check
        %p78 = pneg %p77
      $region14: #{tpu_custom_call.1} parent=5 // pred_check_branch
        %80 = sbr.rel (%p78) target = $region16
      $region15: #{tpu_custom_call.1} parent=5 // pred_region
        // Predicated region
        $region17: #{tpu_custom_call.1} parent=15 // pred_check
          %p81 = pneg %p30
        $region18: #{tpu_custom_call.1} parent=15 // pred_check_branch
          %83 = sbr.rel (%p81) target = $region20
        $region19: #{tpu_custom_call.1} parent=15 // pred_region
          %s84 = sand.u32 %s20, 1
          %s85 = scalar_lea.sflag [#allocation4], %s84
          %s86 = sand.u32 %s20, 1
          %s87 = smul.addr %s86, 64
          %s88 = scalar_lea.vmem [#allocation3], %s87
          %s89 = smul.u32 4, %s10
          %s91 = ssub.s32 1024, 1024
          %92 = vsyncadd %s85, %s91
          %s93 = smul.addr %s89, 2
          %s94 = smul.addr %s93, 128
          %s95 = scalar_lea.hbm %s0, %s94
          %s96 = sshll.u32 %s88, 4
          %s97 = int_to_ptr.vmem [resolvable:$true] %s96
          %102 = dma.hbm_to_vmem [thread:$0]  %s95, 1024, %s97, %s85, 128, 128, 8
        $region20: #{tpu_custom_call.1} parent=15 // pred_fallthru
          _
      $region16: #{tpu_custom_call.1} parent=5 // pred_fallthru
        _
      %p103 = scmp.le.s32.totalorder 1, %s10
      %p104 = scmp.lt.s32.totalorder %s10, 3
      %p105 = pnand %p103, %p104
      %p106 = pneg %p105
      // Predicated region
      $region21: #{tpu_custom_call.1} parent=5 // pred_check
        _
      $region22: #{tpu_custom_call.1} parent=5 // pred_check_branch
        %108 = sbr.rel (%p105) target = $region24
      $region23: #{tpu_custom_call.1} parent=5 // pred_region
        %s109 = ssub.s32 %s10, 1
        %s110 = sand.u32 %s23, 1
        %s111 = scalar_lea.sflag [#allocation4], %s110
        %s112 = sand.u32 %s23, 1
        %s113 = smul.addr %s112, 64
        %s114 = scalar_lea.vmem [#allocation3], %s113
        // Predicated region
        $region25: #{tpu_custom_call.1} parent=23 // pred_check
          %p115 = pneg %p36
        $region26: #{tpu_custom_call.1} parent=23 // pred_check_branch
          %117 = sbr.rel (%p115) target = $region28
        $region27: #{tpu_custom_call.1} parent=23 // pred_region
          %118 = dma.done %s111, 1024
        $region28: #{tpu_custom_call.1} parent=23 // pred_fallthru
          _
        %s119 = sand.u32 %s23, 1
        %s120 = scalar_lea.sflag [#allocation4], %s119
        %s121 = sand.u32 %s23, 1
        %s122 = smul.addr %s121, 64
        %s123 = scalar_lea.vmem [#allocation3], %s122
        %p124 = pneg %p36
        %p125 = pneg %p33
        %p126 = pneg %p62
        %p127 = pneg %p59
        %s128 = smul.u32 4, %s15
        %p129 = scmp.lt.s32.totalorder %s128, 7
        %s130 = scalar_select %p129, %s128, 7
        %s131 = smul.addr %s130, 2
        %s132 = scalar_lea.vmem %s1, %s131
        %s133 = smul.u32 4, %s15
        %s134 = smul.u32 4, %s15
        %p135 = scmp.lt.s32.totalorder %s134, 7
        %s136 = scalar_select %p135, %s134, 7
        %s137 = smul.addr %s136, 2
        %s138 = scalar_lea.vmem %s1, %s137
        %s139 = smul.u32 4, %s15
        %v140 = vld [vmem:[%s114] sm:$0x1]
        %v141 = vld [vmem:[%s114 + $0x10] sm:$0x1]
        %v142 = vld [vmem:[%s114 + $0x20] sm:$0x1]
        %v143 = vld [vmem:[%s114 + $0x30] sm:$0x1]
        %v144 = vld [vmem:[%s114 + $0x1] sm:$0x1]
        %v145 = vld [vmem:[%s114 + $0x11] sm:$0x1]
        %v146 = vld [vmem:[%s114 + $0x21] sm:$0x1]
        %v147 = vld [vmem:[%s114 + $0x31] sm:$0x1]
        %v148 = vmax.f32 %v140, %v144
        %v149 = vmax.f32 %v141, %v145
        %v150 = vmax.f32 %v142, %v146
        %v151 = vmax.f32 %v143, %v147
        %v152 = vld [vmem:[%s114 + $0x2] sm:$0x1]
        %v153 = vld [vmem:[%s114 + $0x12] sm:$0x1]
        %v154 = vld [vmem:[%s114 + $0x22] sm:$0x1]
        %v155 = vld [vmem:[%s114 + $0x32] sm:$0x1]
        %v156 = vmax.f32 %v148, %v152
        %v157 = vmax.f32 %v149, %v153
        %v158 = vmax.f32 %v150, %v154
        %v159 = vmax.f32 %v151, %v155
        %v164 = vrot.slane %v157, 7
        %vm165 = vcmask 1041409
        %v166 = vsel %vm165, %v164, %v156
        %v167 = vrot.slane %v158, 6
        %vm168 = vcmask 1042434
        %v169 = vsel %vm168, %v167, %v166
        %v170 = vrot.slane %v159, 5
        %vm171 = vcmask 1043459
        %v172 = vsel %vm171, %v170, %v169
        %173 = vrot.lane.b32.xlu0 %v172, 2
        %v174 = vpop.permute.xlu0 %173
        %vm176 = vcmask 15360
        %v177 = vsel %vm176, -inf, %v174
        %vm178 = vcmask 146432
        %v179 = vsel %vm178, %v177, -inf
        %181 = vrot.lane.b32.xlu0 %v179, 127
        %v182 = vpop.permute.xlu0 %181
        %v184 = vmax.f32 %v179, %v182
        %185 = vrot.lane.b32.xlu0 %v179, 126
        %v186 = vpop.permute.xlu0 %185
        %v188 = vmax.f32 %v184, %v186
        %189 = vrot.lane.b32.xlu0 %v179, 125
        %v190 = vpop.permute.xlu0 %189
        %v192 = vmax.f32 %v188, %v190
        %193 = vrot.lane.b32.xlu0 %v179, 124
        %v194 = vpop.permute.xlu0 %193
        %v196 = vmax.f32 %v192, %v194
        %198 = vrot.lane.b32.xlu0 %v196, 126
        %v199 = vpop.permute.xlu0 %198
        %201 = vrot.lane.b32.xlu0 %v196, 124
        %v202 = vpop.permute.xlu0 %201
        %204 = vrot.lane.b32.xlu0 %v196, 122
        %v205 = vpop.permute.xlu0 %204
        %207 = vrot.lane.b32.xlu0 %v196, 120
        %v208 = vpop.permute.xlu0 %207
        %210 = vrot.lane.b32.xlu0 %v196, 118
        %v211 = vpop.permute.xlu0 %210
        %vm213 = vcmask 7168
        %v214 = vsel %vm213, %v196, %v199
        %v215 = vsel %vm176, %v214, %v202
        %vm216 = vcmask 23552
        %v217 = vsel %vm216, %v215, %v205
        %vm218 = vcmask 31744
        %v219 = vsel %vm218, %v217, %v208
        %vm220 = vcmask 39936
        %v221 = vsel %vm220, %v219, %v211
        %v224 = vunpack.c.l.s4 1966171168
        %v225 = vunpack.c.0.s8 %v224
        %v226 = vlaneseq
        %v227 = vshrl.u32 %v226, 7
        %v228 = vsub.s32 %v225, %v227
        %v229 = vrot.slane %v221, %v228
        %v230 = vcombine.high %v229, %v229
        %v232 = vunpack.c.l.s4 1966171168
        %v233 = vunpack.c.0.s8 %v232
        %v234 = vlaneseq
        %v235 = vshrl.u32 %v234, 7
        %v236 = vsub.s32 %v233, %v235
        %v237 = vrot.slane %v229, %v236
        %v239 = vunpack.c.l.s4 1966171168
        %v240 = vunpack.c.0.s8 %v239
        %v241 = vlaneseq
        %v242 = vshrl.u32 %v241, 7
        %v243 = vsub.s32 %v240, %v242
        %v244 = vrot.slane %v230, %v243
        %v245 = vcombine.high %v237, %v237
        %v246 = vcombine.high %v244, %v244
        %vm251 = vcmask 40960
        %252 = vst.msk [vmem:[#allocation2] sm:$0x1] %vm251, %v237
        %253 = vst.msk [vmem:[#allocation2 + $0x8] sm:$0x1] %vm251, %v244
        %254 = vst.msk [vmem:[#allocation2 + $0x10] sm:$0x1] %vm251, %v245
        %255 = vst.msk [vmem:[#allocation2 + $0x18] sm:$0x1] %vm251, %v246
        %v256 = vld [vmem:[%s114 + $0x1] sm:$0x1]
        %v257 = vld [vmem:[%s114 + $0x11] sm:$0x1]
        %v258 = vld [vmem:[%s114 + $0x21] sm:$0x1]
        %v259 = vld [vmem:[%s114 + $0x31] sm:$0x1]
        %v260 = vld [vmem:[%s114 + $0x2] sm:$0x1]
        %v261 = vld [vmem:[%s114 + $0x12] sm:$0x1]
        %v262 = vld [vmem:[%s114 + $0x22] sm:$0x1]
        %v263 = vld [vmem:[%s114 + $0x32] sm:$0x1]
        %v264 = vmax.f32 %v256, %v260
        %v265 = vmax.f32 %v257, %v261
        %v266 = vmax.f32 %v258, %v262
        %v267 = vmax.f32 %v259, %v263
        %v268 = vld [vmem:[%s114 + $0x3] sm:$0x1]
        %v269 = vld [vmem:[%s114 + $0x13] sm:$0x1]
        %v270 = vld [vmem:[%s114 + $0x23] sm:$0x1]
        %v271 = vld [vmem:[%s114 + $0x33] sm:$0x1]
        %v272 = vmax.f32 %v264, %v268
        %v273 = vmax.f32 %v265, %v269
        %v274 = vmax.f32 %v266, %v270
        %v275 = vmax.f32 %v267, %v271
        %v276 = vld [vmem:[%s114 + $0x4] sm:$0x1]
        %v277 = vld [vmem:[%s114 + $0x14] sm:$0x1]
        %v278 = vld [vmem:[%s114 + $0x24] sm:$0x1]
        %v279 = vld [vmem:[%s114 + $0x34] sm:$0x1]
        %v280 = vmax.f32 %v272, %v276
        %v281 = vmax.f32 %v273, %v277
        %v282 = vmax.f32 %v274, %v278
        %v283 = vmax.f32 %v275, %v279
        %v284 = vld [vmem:[%s114 + $0x5] sm:$0x1]
        %v285 = vld [vmem:[%s114 + $0x15] sm:$0x1]
        %v286 = vld [vmem:[%s114 + $0x25] sm:$0x1]
        %v287 = vld [vmem:[%s114 + $0x35] sm:$0x1]
        %v288 = vmax.f32 %v280, %v284
        %v289 = vmax.f32 %v281, %v285
        %v290 = vmax.f32 %v282, %v286
        %v291 = vmax.f32 %v283, %v287
        %v296 = vrot.slane %v289, 7
        %v297 = vsel %vm165, %v296, %v288
        %v298 = vrot.slane %v290, 6
        %v299 = vsel %vm168, %v298, %v297
        %v300 = vrot.slane %v291, 5
        %v301 = vsel %vm171, %v300, %v299
        %302 = vrot.lane.b32.xlu0 %v301, 2
        %v303 = vpop.permute.xlu0 %302
        %v305 = vsel %vm176, -inf, %v303
        %v306 = vsel %vm178, %v305, -inf
        %308 = vrot.lane.b32.xlu0 %v306, 127
        %v309 = vpop.permute.xlu0 %308
        %v311 = vmax.f32 %v306, %v309
        %312 = vrot.lane.b32.xlu0 %v306, 126
        %v313 = vpop.permute.xlu0 %312
        %v315 = vmax.f32 %v311, %v313
        %316 = vrot.lane.b32.xlu0 %v306, 125
        %v317 = vpop.permute.xlu0 %316
        %v319 = vmax.f32 %v315, %v317
        %320 = vrot.lane.b32.xlu0 %v306, 124
        %v321 = vpop.permute.xlu0 %320
        %v323 = vmax.f32 %v319, %v321
        %325 = vrot.lane.b32.xlu0 %v323, 126
        %v326 = vpop.permute.xlu0 %325
        %328 = vrot.lane.b32.xlu0 %v323, 124
        %v329 = vpop.permute.xlu0 %328
        %331 = vrot.lane.b32.xlu0 %v323, 122
        %v332 = vpop.permute.xlu0 %331
        %334 = vrot.lane.b32.xlu0 %v323, 120
        %v335 = vpop.permute.xlu0 %334
        %337 = vrot.lane.b32.xlu0 %v323, 118
        %v338 = vpop.permute.xlu0 %337
        %v340 = vsel %vm213, %v323, %v326
        %v341 = vsel %vm176, %v340, %v329
        %v342 = vsel %vm216, %v341, %v332
        %v343 = vsel %vm218, %v342, %v335
        %v344 = vsel %vm220, %v343, %v338
        %v347 = vunpack.c.l.s4 1966171168
        %v348 = vunpack.c.0.s8 %v347
        %v349 = vlaneseq
        %v350 = vshrl.u32 %v349, 7
        %v351 = vsub.s32 %v348, %v350
        %v352 = vrot.slane %v344, %v351
        %v353 = vcombine.high %v352, %v352
        %v355 = vunpack.c.l.s4 1966171168
        %v356 = vunpack.c.0.s8 %v355
        %v357 = vlaneseq
        %v358 = vshrl.u32 %v357, 7
        %v359 = vsub.s32 %v356, %v358
        %v360 = vrot.slane %v352, %v359
        %v362 = vunpack.c.l.s4 1966171168
        %v363 = vunpack.c.0.s8 %v362
        %v364 = vlaneseq
        %v365 = vshrl.u32 %v364, 7
        %v366 = vsub.s32 %v363, %v365
        %v367 = vrot.slane %v353, %v366
        %v368 = vcombine.high %v360, %v360
        %v369 = vcombine.high %v367, %v367
        %374 = vst.msk [vmem:[#allocation2 + $0x1] sm:$0x1] %vm251, %v360
        %375 = vst.msk [vmem:[#allocation2 + $0x9] sm:$0x1] %vm251, %v367
        %376 = vst.msk [vmem:[#allocation2 + $0x11] sm:$0x1] %vm251, %v368
        %377 = vst.msk [vmem:[#allocation2 + $0x19] sm:$0x1] %vm251, %v369
        %v378 = vld [vmem:[%s114 + $0x4] sm:$0x1]
        %v379 = vld [vmem:[%s114 + $0x14] sm:$0x1]
        %v380 = vld [vmem:[%s114 + $0x24] sm:$0x1]
        %v381 = vld [vmem:[%s114 + $0x34] sm:$0x1]
        %v382 = vld [vmem:[%s114 + $0x5] sm:$0x1]
        %v383 = vld [vmem:[%s114 + $0x15] sm:$0x1]
        %v384 = vld [vmem:[%s114 + $0x25] sm:$0x1]
        %v385 = vld [vmem:[%s114 + $0x35] sm:$0x1]
        %v386 = vmax.f32 %v378, %v382
        %v387 = vmax.f32 %v379, %v383
        %v388 = vmax.f32 %v380, %v384
        %v389 = vmax.f32 %v381, %v385
        %v390 = vld [vmem:[%s114 + $0x6] sm:$0x1]
        %v391 = vld [vmem:[%s114 + $0x16] sm:$0x1]
        %v392 = vld [vmem:[%s114 + $0x26] sm:$0x1]
        %v393 = vld [vmem:[%s114 + $0x36] sm:$0x1]
        %v394 = vmax.f32 %v386, %v390
        %v395 = vmax.f32 %v387, %v391
        %v396 = vmax.f32 %v388, %v392
        %v397 = vmax.f32 %v389, %v393
        %v398 = vld [vmem:[%s114 + $0x7] sm:$0x1]
        %v399 = vld [vmem:[%s114 + $0x17] sm:$0x1]
        %v400 = vld [vmem:[%s114 + $0x27] sm:$0x1]
        %v401 = vld [vmem:[%s114 + $0x37] sm:$0x1]
        %v402 = vmax.f32 %v394, %v398
        %v403 = vmax.f32 %v395, %v399
        %v404 = vmax.f32 %v396, %v400
        %v405 = vmax.f32 %v397, %v401
        %v406 = vld [vmem:[%s114 + $0x8] sm:$0x1]
        %v407 = vld [vmem:[%s114 + $0x18] sm:$0x1]
        %v408 = vld [vmem:[%s114 + $0x28] sm:$0x1]
        %v409 = vld [vmem:[%s114 + $0x38] sm:$0x1]
        %v410 = vmax.f32 %v402, %v406
        %v411 = vmax.f32 %v403, %v407
        %v412 = vmax.f32 %v404, %v408
        %v413 = vmax.f32 %v405, %v409
        %v418 = vrot.slane %v411, 7
        %v419 = vsel %vm165, %v418, %v410
        %v420 = vrot.slane %v412, 6
        %v421 = vsel %vm168, %v420, %v419
        %v422 = vrot.slane %v413, 5
        %v423 = vsel %vm171, %v422, %v421
        %424 = vrot.lane.b32.xlu0 %v423, 2
        %v425 = vpop.permute.xlu0 %424
        %v427 = vsel %vm176, -inf, %v425
        %v428 = vsel %vm178, %v427, -inf
        %430 = vrot.lane.b32.xlu0 %v428, 127
        %v431 = vpop.permute.xlu0 %430
        %v433 = vmax.f32 %v428, %v431
        %434 = vrot.lane.b32.xlu0 %v428, 126
        %v435 = vpop.permute.xlu0 %434
        %v437 = vmax.f32 %v433, %v435
        %438 = vrot.lane.b32.xlu0 %v428, 125
        %v439 = vpop.permute.xlu0 %438
        %v441 = vmax.f32 %v437, %v439
        %442 = vrot.lane.b32.xlu0 %v428, 124
        %v443 = vpop.permute.xlu0 %442
        %v445 = vmax.f32 %v441, %v443
        %447 = vrot.lane.b32.xlu0 %v445, 126
        %v448 = vpop.permute.xlu0 %447
        %450 = vrot.lane.b32.xlu0 %v445, 124
        %v451 = vpop.permute.xlu0 %450
        %453 = vrot.lane.b32.xlu0 %v445, 122
        %v454 = vpop.permute.xlu0 %453
        %456 = vrot.lane.b32.xlu0 %v445, 120
        %v457 = vpop.permute.xlu0 %456
        %459 = vrot.lane.b32.xlu0 %v445, 118
        %v460 = vpop.permute.xlu0 %459
        %v462 = vsel %vm213, %v445, %v448
        %v463 = vsel %vm176, %v462, %v451
        %v464 = vsel %vm216, %v463, %v454
        %v465 = vsel %vm218, %v464, %v457
        %v466 = vsel %vm220, %v465, %v460
        %v469 = vunpack.c.l.s4 1966171168
        %v470 = vunpack.c.0.s8 %v469
        %v471 = vlaneseq
        %v472 = vshrl.u32 %v471, 7
        %v473 = vsub.s32 %v470, %v472
        %v474 = vrot.slane %v466, %v473
        %v475 = vcombine.high %v474, %v474
        %v477 = vunpack.c.l.s4 1966171168
        %v478 = vunpack.c.0.s8 %v477
        %v479 = vlaneseq
        %v480 = vshrl.u32 %v479, 7
        %v481 = vsub.s32 %v478, %v480
        %v482 = vrot.slane %v474, %v481
        %v484 = vunpack.c.l.s4 1966171168
        %v485 = vunpack.c.0.s8 %v484
        %v486 = vlaneseq
        %v487 = vshrl.u32 %v486, 7
        %v488 = vsub.s32 %v485, %v487
        %v489 = vrot.slane %v475, %v488
        %v490 = vcombine.high %v482, %v482
        %v491 = vcombine.high %v489, %v489
        %496 = vst.msk [vmem:[#allocation2 + $0x2] sm:$0x1] %vm251, %v482
        %497 = vst.msk [vmem:[#allocation2 + $0xa] sm:$0x1] %vm251, %v489
        %498 = vst.msk [vmem:[#allocation2 + $0x12] sm:$0x1] %vm251, %v490
        %499 = vst.msk [vmem:[#allocation2 + $0x1a] sm:$0x1] %vm251, %v491
        %v500 = vld [vmem:[%s114 + $0x7] sm:$0x1]
        %v501 = vld [vmem:[%s114 + $0x17] sm:$0x1]
        %v502 = vld [vmem:[%s114 + $0x27] sm:$0x1]
        %v503 = vld [vmem:[%s114 + $0x37] sm:$0x1]
        %v504 = vld [vmem:[%s114 + $0x8] sm:$0x1]
        %v505 = vld [vmem:[%s114 + $0x18] sm:$0x1]
        %v506 = vld [vmem:[%s114 + $0x28] sm:$0x1]
        %v507 = vld [vmem:[%s114 + $0x38] sm:$0x1]
        %v508 = vmax.f32 %v500, %v504
        %v509 = vmax.f32 %v501, %v505
        %v510 = vmax.f32 %v502, %v506
        %v511 = vmax.f32 %v503, %v507
        %v512 = vld [vmem:[%s114 + $0x9] sm:$0x1]
        %v513 = vld [vmem:[%s114 + $0x19] sm:$0x1]
        %v514 = vld [vmem:[%s114 + $0x29] sm:$0x1]
        %v515 = vld [vmem:[%s114 + $0x39] sm:$0x1]
        %v516 = vmax.f32 %v508, %v512
        %v517 = vmax.f32 %v509, %v513
        %v518 = vmax.f32 %v510, %v514
        %v519 = vmax.f32 %v511, %v515
        %v520 = vld [vmem:[%s114 + $0xa] sm:$0x1]
        %v521 = vld [vmem:[%s114 + $0x1a] sm:$0x1]
        %v522 = vld [vmem:[%s114 + $0x2a] sm:$0x1]
        %v523 = vld [vmem:[%s114 + $0x3a] sm:$0x1]
        %v524 = vmax.f32 %v516, %v520
        %v525 = vmax.f32 %v517, %v521
        %v526 = vmax.f32 %v518, %v522
        %v527 = vmax.f32 %v519, %v523
        %v528 = vld [vmem:[%s114 + $0xb] sm:$0x1]
        %v529 = vld [vmem:[%s114 + $0x1b] sm:$0x1]
        %v530 = vld [vmem:[%s114 + $0x2b] sm:$0x1]
        %v531 = vld [vmem:[%s114 + $0x3b] sm:$0x1]
        %v532 = vmax.f32 %v524, %v528
        %v533 = vmax.f32 %v525, %v529
        %v534 = vmax.f32 %v526, %v530
        %v535 = vmax.f32 %v527, %v531
        %v540 = vrot.slane %v533, 7
        %v541 = vsel %vm165, %v540, %v532
        %v542 = vrot.slane %v534, 6
        %v543 = vsel %vm168, %v542, %v541
        %v544 = vrot.slane %v535, 5
        %v545 = vsel %vm171, %v544, %v543
        %546 = vrot.lane.b32.xlu0 %v545, 2
        %v547 = vpop.permute.xlu0 %546
        %v549 = vsel %vm176, -inf, %v547
        %v550 = vsel %vm178, %v549, -inf
        %552 = vrot.lane.b32.xlu0 %v550, 127
        %v553 = vpop.permute.xlu0 %552
        %v555 = vmax.f32 %v550, %v553
        %556 = vrot.lane.b32.xlu0 %v550, 126
        %v557 = vpop.permute.xlu0 %556
        %v559 = vmax.f32 %v555, %v557
        %560 = vrot.lane.b32.xlu0 %v550, 125
        %v561 = vpop.permute.xlu0 %560
        %v563 = vmax.f32 %v559, %v561
        %564 = vrot.lane.b32.xlu0 %v550, 124
        %v565 = vpop.permute.xlu0 %564
        %v567 = vmax.f32 %v563, %v565
        %569 = vrot.lane.b32.xlu0 %v567, 126
        %v570 = vpop.permute.xlu0 %569
        %572 = vrot.lane.b32.xlu0 %v567, 124
        %v573 = vpop.permute.xlu0 %572
        %575 = vrot.lane.b32.xlu0 %v567, 122
        %v576 = vpop.permute.xlu0 %575
        %578 = vrot.lane.b32.xlu0 %v567, 120
        %v579 = vpop.permute.xlu0 %578
        %581 = vrot.lane.b32.xlu0 %v567, 118
        %v582 = vpop.permute.xlu0 %581
        %v584 = vsel %vm213, %v567, %v570
        %v585 = vsel %vm176, %v584, %v573
        %v586 = vsel %vm216, %v585, %v576
        %v587 = vsel %vm218, %v586, %v579
        %v588 = vsel %vm220, %v587, %v582
        %v591 = vunpack.c.l.s4 1966171168
        %v592 = vunpack.c.0.s8 %v591
        %v593 = vlaneseq
        %v594 = vshrl.u32 %v593, 7
        %v595 = vsub.s32 %v592, %v594
        %v596 = vrot.slane %v588, %v595
        %v597 = vcombine.high %v596, %v596
        %v599 = vunpack.c.l.s4 1966171168
        %v600 = vunpack.c.0.s8 %v599
        %v601 = vlaneseq
        %v602 = vshrl.u32 %v601, 7
        %v603 = vsub.s32 %v600, %v602
        %v604 = vrot.slane %v596, %v603
        %v606 = vunpack.c.l.s4 1966171168
        %v607 = vunpack.c.0.s8 %v606
        %v608 = vlaneseq
        %v609 = vshrl.u32 %v608, 7
        %v610 = vsub.s32 %v607, %v609
        %v611 = vrot.slane %v597, %v610
        %v612 = vcombine.high %v604, %v604
        %v613 = vcombine.high %v611, %v611
        %618 = vst.msk [vmem:[#allocation2 + $0x3] sm:$0x1] %vm251, %v604
        %619 = vst.msk [vmem:[#allocation2 + $0xb] sm:$0x1] %vm251, %v611
        %620 = vst.msk [vmem:[#allocation2 + $0x13] sm:$0x1] %vm251, %v612
        %621 = vst.msk [vmem:[#allocation2 + $0x1b] sm:$0x1] %vm251, %v613
        %v622 = vld [vmem:[%s114 + $0xa] sm:$0x1]
        %v623 = vld [vmem:[%s114 + $0x1a] sm:$0x1]
        %v624 = vld [vmem:[%s114 + $0x2a] sm:$0x1]
        %v625 = vld [vmem:[%s114 + $0x3a] sm:$0x1]
        %v626 = vld [vmem:[%s114 + $0xb] sm:$0x1]
        %v627 = vld [vmem:[%s114 + $0x1b] sm:$0x1]
        %v628 = vld [vmem:[%s114 + $0x2b] sm:$0x1]
        %v629 = vld [vmem:[%s114 + $0x3b] sm:$0x1]
        %v630 = vmax.f32 %v622, %v626
        %v631 = vmax.f32 %v623, %v627
        %v632 = vmax.f32 %v624, %v628
        %v633 = vmax.f32 %v625, %v629
        %v634 = vld [vmem:[%s114 + $0xc] sm:$0x1]
        %v635 = vld [vmem:[%s114 + $0x1c] sm:$0x1]
        %v636 = vld [vmem:[%s114 + $0x2c] sm:$0x1]
        %v637 = vld [vmem:[%s114 + $0x3c] sm:$0x1]
        %v638 = vmax.f32 %v630, %v634
        %v639 = vmax.f32 %v631, %v635
        %v640 = vmax.f32 %v632, %v636
        %v641 = vmax.f32 %v633, %v637
        %v642 = vld [vmem:[%s114 + $0xd] sm:$0x1]
        %v643 = vld [vmem:[%s114 + $0x1d] sm:$0x1]
        %v644 = vld [vmem:[%s114 + $0x2d] sm:$0x1]
        %v645 = vld [vmem:[%s114 + $0x3d] sm:$0x1]
        %v646 = vmax.f32 %v638, %v642
        %v647 = vmax.f32 %v639, %v643
        %v648 = vmax.f32 %v640, %v644
        %v649 = vmax.f32 %v641, %v645
        %v650 = vld [vmem:[%s114 + $0xe] sm:$0x1]
        %v651 = vld [vmem:[%s114 + $0x1e] sm:$0x1]
        %v652 = vld [vmem:[%s114 + $0x2e] sm:$0x1]
        %v653 = vld [vmem:[%s114 + $0x3e] sm:$0x1]
        %v654 = vmax.f32 %v646, %v650
        %v655 = vmax.f32 %v647, %v651
        %v656 = vmax.f32 %v648, %v652
        %v657 = vmax.f32 %v649, %v653
        %v662 = vrot.slane %v655, 7
        %v663 = vsel %vm165, %v662, %v654
        %v664 = vrot.slane %v656, 6
        %v665 = vsel %vm168, %v664, %v663
        %v666 = vrot.slane %v657, 5
        %v667 = vsel %vm171, %v666, %v665
        %668 = vrot.lane.b32.xlu0 %v667, 2
        %v669 = vpop.permute.xlu0 %668
        %v671 = vsel %vm176, -inf, %v669
        %v672 = vsel %vm178, %v671, -inf
        %674 = vrot.lane.b32.xlu0 %v672, 127
        %v675 = vpop.permute.xlu0 %674
        %v677 = vmax.f32 %v672, %v675
        %678 = vrot.lane.b32.xlu0 %v672, 126
        %v679 = vpop.permute.xlu0 %678
        %v681 = vmax.f32 %v677, %v679
        %682 = vrot.lane.b32.xlu0 %v672, 125
        %v683 = vpop.permute.xlu0 %682
        %v685 = vmax.f32 %v681, %v683
        %686 = vrot.lane.b32.xlu0 %v672, 124
        %v687 = vpop.permute.xlu0 %686
        %v689 = vmax.f32 %v685, %v687
        %691 = vrot.lane.b32.xlu0 %v689, 126
        %v692 = vpop.permute.xlu0 %691
        %694 = vrot.lane.b32.xlu0 %v689, 124
        %v695 = vpop.permute.xlu0 %694
        %697 = vrot.lane.b32.xlu0 %v689, 122
        %v698 = vpop.permute.xlu0 %697
        %700 = vrot.lane.b32.xlu0 %v689, 120
        %v701 = vpop.permute.xlu0 %700
        %703 = vrot.lane.b32.xlu0 %v689, 118
        %v704 = vpop.permute.xlu0 %703
        %v706 = vsel %vm213, %v689, %v692
        %v707 = vsel %vm176, %v706, %v695
        %v708 = vsel %vm216, %v707, %v698
        %v709 = vsel %vm218, %v708, %v701
        %v710 = vsel %vm220, %v709, %v704
        %v713 = vunpack.c.l.s4 1966171168
        %v714 = vunpack.c.0.s8 %v713
        %v715 = vlaneseq
        %v716 = vshrl.u32 %v715, 7
        %v717 = vsub.s32 %v714, %v716
        %v718 = vrot.slane %v710, %v717
        %v719 = vcombine.high %v718, %v718
        %v721 = vunpack.c.l.s4 1966171168
        %v722 = vunpack.c.0.s8 %v721
        %v723 = vlaneseq
        %v724 = vshrl.u32 %v723, 7
        %v725 = vsub.s32 %v722, %v724
        %v726 = vrot.slane %v718, %v725
        %v728 = vunpack.c.l.s4 1966171168
        %v729 = vunpack.c.0.s8 %v728
        %v730 = vlaneseq
        %v731 = vshrl.u32 %v730, 7
        %v732 = vsub.s32 %v729, %v731
        %v733 = vrot.slane %v719, %v732
        %v734 = vcombine.high %v726, %v726
        %v735 = vcombine.high %v733, %v733
        %740 = vst.msk [vmem:[#allocation2 + $0x4] sm:$0x1] %vm251, %v726
        %741 = vst.msk [vmem:[#allocation2 + $0xc] sm:$0x1] %vm251, %v733
        %742 = vst.msk [vmem:[#allocation2 + $0x14] sm:$0x1] %vm251, %v734
        %743 = vst.msk [vmem:[#allocation2 + $0x1c] sm:$0x1] %vm251, %v735
        %v744 = vld [vmem:[%s114 + $0xd] sm:$0x1]
        %v745 = vld [vmem:[%s114 + $0x1d] sm:$0x1]
        %v746 = vld [vmem:[%s114 + $0x2d] sm:$0x1]
        %v747 = vld [vmem:[%s114 + $0x3d] sm:$0x1]
        %v748 = vld [vmem:[%s114 + $0xe] sm:$0x1]
        %v749 = vld [vmem:[%s114 + $0x1e] sm:$0x1]
        %v750 = vld [vmem:[%s114 + $0x2e] sm:$0x1]
        %v751 = vld [vmem:[%s114 + $0x3e] sm:$0x1]
        %v752 = vmax.f32 %v744, %v748
        %v753 = vmax.f32 %v745, %v749
        %v754 = vmax.f32 %v746, %v750
        %v755 = vmax.f32 %v747, %v751
        %v756 = vld [vmem:[%s114 + $0xf] sm:$0x1]
        %v757 = vld [vmem:[%s114 + $0x1f] sm:$0x1]
        %v758 = vld [vmem:[%s114 + $0x2f] sm:$0x1]
        %v759 = vld [vmem:[%s114 + $0x3f] sm:$0x1]
        %v760 = vmax.f32 %v752, %v756
        %v761 = vmax.f32 %v753, %v757
        %v762 = vmax.f32 %v754, %v758
        %v763 = vmax.f32 %v755, %v759
        %v768 = vrot.slane %v761, 7
        %v769 = vsel %vm165, %v768, %v760
        %v770 = vrot.slane %v762, 6
        %v771 = vsel %vm168, %v770, %v769
        %v772 = vrot.slane %v763, 5
        %v773 = vsel %vm171, %v772, %v771
        %774 = vrot.lane.b32.xlu0 %v773, 2
        %v775 = vpop.permute.xlu0 %774
        %v777 = vsel %vm176, -inf, %v775
        %v778 = vsel %vm178, %v777, -inf
        %780 = vrot.lane.b32.xlu0 %v778, 127
        %v781 = vpop.permute.xlu0 %780
        %v783 = vmax.f32 %v778, %v781
        %784 = vrot.lane.b32.xlu0 %v778, 126
        %v785 = vpop.permute.xlu0 %784
        %v787 = vmax.f32 %v783, %v785
        %788 = vrot.lane.b32.xlu0 %v778, 125
        %v789 = vpop.permute.xlu0 %788
        %v791 = vmax.f32 %v787, %v789
        %792 = vrot.lane.b32.xlu0 %v778, 124
        %v793 = vpop.permute.xlu0 %792
        %v795 = vmax.f32 %v791, %v793
        %797 = vrot.lane.b32.xlu0 %v795, 126
        %v798 = vpop.permute.xlu0 %797
        %800 = vrot.lane.b32.xlu0 %v795, 124
        %v801 = vpop.permute.xlu0 %800
        %803 = vrot.lane.b32.xlu0 %v795, 122
        %v804 = vpop.permute.xlu0 %803
        %806 = vrot.lane.b32.xlu0 %v795, 120
        %v807 = vpop.permute.xlu0 %806
        %809 = vrot.lane.b32.xlu0 %v795, 118
        %v810 = vpop.permute.xlu0 %809
        %v812 = vsel %vm213, %v795, %v798
        %v813 = vsel %vm176, %v812, %v801
        %v814 = vsel %vm216, %v813, %v804
        %v815 = vsel %vm218, %v814, %v807
        %v816 = vsel %vm220, %v815, %v810
        %v819 = vunpack.c.l.s4 1966171168
        %v820 = vunpack.c.0.s8 %v819
        %v821 = vlaneseq
        %v822 = vshrl.u32 %v821, 7
        %v823 = vsub.s32 %v820, %v822
        %v824 = vrot.slane %v816, %v823
        %v825 = vcombine.high %v824, %v824
        %v827 = vunpack.c.l.s4 1966171168
        %v828 = vunpack.c.0.s8 %v827
        %v829 = vlaneseq
        %v830 = vshrl.u32 %v829, 7
        %v831 = vsub.s32 %v828, %v830
        %v832 = vrot.slane %v824, %v831
        %v834 = vunpack.c.l.s4 1966171168
        %v835 = vunpack.c.0.s8 %v834
        %v836 = vlaneseq
        %v837 = vshrl.u32 %v836, 7
        %v838 = vsub.s32 %v835, %v837
        %v839 = vrot.slane %v825, %v838
        %v840 = vcombine.high %v832, %v832
        %v841 = vcombine.high %v839, %v839
        %846 = vst.msk [vmem:[#allocation2 + $0x5] sm:$0x1] %vm251, %v832
        %847 = vst.msk [vmem:[#allocation2 + $0xd] sm:$0x1] %vm251, %v839
        %848 = vst.msk [vmem:[#allocation2 + $0x15] sm:$0x1] %vm251, %v840
        %849 = vst.msk [vmem:[#allocation2 + $0x1d] sm:$0x1] %vm251, %v841
        %v850 = vld [vmem:[#allocation2] sm:$0x1]
        %v851 = vld [vmem:[#allocation2 + $0x8] sm:$0x1]
        %v852 = vld [vmem:[#allocation2 + $0x10] sm:$0x1]
        %v853 = vld [vmem:[#allocation2 + $0x18] sm:$0x1]
        %v854 = vld [vmem:[#allocation2 + $0x1] sm:$0x1]
        %v855 = vld [vmem:[#allocation2 + $0x9] sm:$0x1]
        %v856 = vld [vmem:[#allocation2 + $0x11] sm:$0x1]
        %v857 = vld [vmem:[#allocation2 + $0x19] sm:$0x1]
        %v858 = vmax.f32 %v850, %v854
        %v859 = vmax.f32 %v851, %v855
        %v860 = vmax.f32 %v852, %v856
        %v861 = vmax.f32 %v853, %v857
        %v862 = vld [vmem:[#allocation2 + $0x2] sm:$0x1]
        %v863 = vld [vmem:[#allocation2 + $0xa] sm:$0x1]
        %v864 = vld [vmem:[#allocation2 + $0x12] sm:$0x1]
        %v865 = vld [vmem:[#allocation2 + $0x1a] sm:$0x1]
        %v866 = vmax.f32 %v858, %v862
        %v867 = vmax.f32 %v859, %v863
        %v868 = vmax.f32 %v860, %v864
        %v869 = vmax.f32 %v861, %v865
        %v874 = vrot.slane %v867, 7
        %v875 = vsel %vm165, %v874, %v866
        %v876 = vrot.slane %v868, 6
        %v877 = vsel %vm168, %v876, %v875
        %v878 = vrot.slane %v869, 5
        %v879 = vsel %vm171, %v878, %v877
        %880 = vrot.lane.b32.xlu0 %v879, 2
        %v881 = vpop.permute.xlu0 %880
        %v883 = vsel %vm176, -inf, %v881
        %vm884 = vcmask 64512
        %v885 = vsel %vm884, %v883, -inf
        %887 = vrot.lane.b32.xlu0 %v885, 127
        %v888 = vpop.permute.xlu0 %887
        %v890 = vmax.f32 %v885, %v888
        %891 = vrot.lane.b32.xlu0 %v885, 126
        %v892 = vpop.permute.xlu0 %891
        %v894 = vmax.f32 %v890, %v892
        %895 = vrot.lane.b32.xlu0 %v885, 125
        %v896 = vpop.permute.xlu0 %895
        %v898 = vmax.f32 %v894, %v896
        %899 = vrot.lane.b32.xlu0 %v885, 124
        %v900 = vpop.permute.xlu0 %899
        %v902 = vmax.f32 %v898, %v900
        %904 = vrot.lane.b32.xlu0 %v902, 126
        %v905 = vpop.permute.xlu0 %904
        %v907 = vsel %vm213, %v902, %v905
        %v908 = vmax.f32 %v907, 0.365801
        %v909 = vmin.f32 %v908, 1.5579
        %v910 = vmul.f32 %v909, 2.0
        %v913 = vunpack.c.l.s4 1966171168
        %v914 = vunpack.c.0.s8 %v913
        %v915 = vlaneseq
        %v916 = vshrl.u32 %v915, 7
        %v917 = vsub.s32 %v914, %v916
        %v918 = vrot.slane %v910, %v917
        %v919 = vcombine.high %v918, %v918
        %v921 = vunpack.c.l.s4 1966171168
        %v922 = vunpack.c.0.s8 %v921
        %v923 = vlaneseq
        %v924 = vshrl.u32 %v923, 7
        %v925 = vsub.s32 %v922, %v924
        %v926 = vrot.slane %v918, %v925
        %v928 = vunpack.c.l.s4 1966171168
        %v929 = vunpack.c.0.s8 %v928
        %v930 = vlaneseq
        %v931 = vshrl.u32 %v930, 7
        %v932 = vsub.s32 %v929, %v931
        %v933 = vrot.slane %v919, %v932
        %v934 = vcombine.high %v926, %v926
        %v935 = vcombine.high %v933, %v933
        %vm940 = vcmask 8192
        %941 = vst.msk [vmem:[%s138] sm:$0x1] %vm940, %v926
        %942 = vst.msk [vmem:[%s138 + $0x2] sm:$0x1] %vm940, %v933
        %943 = vst.msk [vmem:[%s138 + $0x4] sm:$0x1] %vm940, %v934
        %944 = vst.msk [vmem:[%s138 + $0x6] sm:$0x1] %vm940, %v935
        %v945 = vld [vmem:[#allocation2 + $0x1] sm:$0x1]
        %v946 = vld [vmem:[#allocation2 + $0x9] sm:$0x1]
        %v947 = vld [vmem:[#allocation2 + $0x11] sm:$0x1]
        %v948 = vld [vmem:[#allocation2 + $0x19] sm:$0x1]
        %v949 = vld [vmem:[#allocation2 + $0x2] sm:$0x1]
        %v950 = vld [vmem:[#allocation2 + $0xa] sm:$0x1]
        %v951 = vld [vmem:[#allocation2 + $0x12] sm:$0x1]
        %v952 = vld [vmem:[#allocation2 + $0x1a] sm:$0x1]
        %v953 = vmax.f32 %v945, %v949
        %v954 = vmax.f32 %v946, %v950
        %v955 = vmax.f32 %v947, %v951
        %v956 = vmax.f32 %v948, %v952
        %v957 = vld [vmem:[#allocation2 + $0x3] sm:$0x1]
        %v958 = vld [vmem:[#allocation2 + $0xb] sm:$0x1]
        %v959 = vld [vmem:[#allocation2 + $0x13] sm:$0x1]
        %v960 = vld [vmem:[#allocation2 + $0x1b] sm:$0x1]
        %v961 = vmax.f32 %v953, %v957
        %v962 = vmax.f32 %v954, %v958
        %v963 = vmax.f32 %v955, %v959
        %v964 = vmax.f32 %v956, %v960
        %v965 = vld [vmem:[#allocation2 + $0x4] sm:$0x1]
        %v966 = vld [vmem:[#allocation2 + $0xc] sm:$0x1]
        %v967 = vld [vmem:[#allocation2 + $0x14] sm:$0x1]
        %v968 = vld [vmem:[#allocation2 + $0x1c] sm:$0x1]
        %v969 = vmax.f32 %v961, %v965
        %v970 = vmax.f32 %v962, %v966
        %v971 = vmax.f32 %v963, %v967
        %v972 = vmax.f32 %v964, %v968
        %v973 = vld [vmem:[#allocation2 + $0x5] sm:$0x1]
        %v974 = vld [vmem:[#allocation2 + $0xd] sm:$0x1]
        %v975 = vld [vmem:[#allocation2 + $0x15] sm:$0x1]
        %v976 = vld [vmem:[#allocation2 + $0x1d] sm:$0x1]
        %v977 = vmax.f32 %v969, %v973
        %v978 = vmax.f32 %v970, %v974
        %v979 = vmax.f32 %v971, %v975
        %v980 = vmax.f32 %v972, %v976
        %v985 = vrot.slane %v978, 7
        %v986 = vsel %vm165, %v985, %v977
        %v987 = vrot.slane %v979, 6
        %v988 = vsel %vm168, %v987, %v986
        %v989 = vrot.slane %v980, 5
        %v990 = vsel %vm171, %v989, %v988
        %991 = vrot.lane.b32.xlu0 %v990, 2
        %v992 = vpop.permute.xlu0 %991
        %v994 = vsel %vm176, -inf, %v992
        %v995 = vsel %vm884, %v994, -inf
        %997 = vrot.lane.b32.xlu0 %v995, 127
        %v998 = vpop.permute.xlu0 %997
        %v1000 = vmax.f32 %v995, %v998
        %1001 = vrot.lane.b32.xlu0 %v995, 126
        %v1002 = vpop.permute.xlu0 %1001
        %v1004 = vmax.f32 %v1000, %v1002
        %1005 = vrot.lane.b32.xlu0 %v995, 125
        %v1006 = vpop.permute.xlu0 %1005
        %v1008 = vmax.f32 %v1004, %v1006
        %1009 = vrot.lane.b32.xlu0 %v995, 124
        %v1010 = vpop.permute.xlu0 %1009
        %v1012 = vmax.f32 %v1008, %v1010
        %1014 = vrot.lane.b32.xlu0 %v1012, 126
        %v1015 = vpop.permute.xlu0 %1014
        %v1017 = vsel %vm213, %v1012, %v1015
        %v1018 = vmax.f32 %v1017, 0.365801
        %v1019 = vmin.f32 %v1018, 1.5579
        %v1020 = vmul.f32 %v1019, 2.0
        %v1023 = vunpack.c.l.s4 1966171168
        %v1024 = vunpack.c.0.s8 %v1023
        %v1025 = vlaneseq
        %v1026 = vshrl.u32 %v1025, 7
        %v1027 = vsub.s32 %v1024, %v1026
        %v1028 = vrot.slane %v1020, %v1027
        %v1029 = vcombine.high %v1028, %v1028
        %v1031 = vunpack.c.l.s4 1966171168
        %v1032 = vunpack.c.0.s8 %v1031
        %v1033 = vlaneseq
        %v1034 = vshrl.u32 %v1033, 7
        %v1035 = vsub.s32 %v1032, %v1034
        %v1036 = vrot.slane %v1028, %v1035
        %v1038 = vunpack.c.l.s4 1966171168
        %v1039 = vunpack.c.0.s8 %v1038
        %v1040 = vlaneseq
        %v1041 = vshrl.u32 %v1040, 7
        %v1042 = vsub.s32 %v1039, %v1041
        %v1043 = vrot.slane %v1029, %v1042
        %v1044 = vcombine.high %v1036, %v1036
        %v1045 = vcombine.high %v1043, %v1043
        %1050 = vst.msk [vmem:[%s138 + $0x1] sm:$0x1] %vm940, %v1036
        %1051 = vst.msk [vmem:[%s138 + $0x3] sm:$0x1] %vm940, %v1043
        %1052 = vst.msk [vmem:[%s138 + $0x5] sm:$0x1] %vm940, %v1044
        %1053 = vst.msk [vmem:[%s138 + $0x7] sm:$0x1] %vm940, %v1045
        %s1054 = smul.u32 4, %s15
        %p1055 = scmp.lt.s32.totalorder %s1054, 7
        %s1056 = scalar_select %p1055, %s1054, 7
        %s1057 = smul.addr %s1056, 2
        %s1058 = scalar_lea.vmem %s1, %s1057
        // Predicated region
        $region29: #{tpu_custom_call.1} parent=23 // pred_check
          %p1059 = pneg %p59
        $region30: #{tpu_custom_call.1} parent=23 // pred_check_branch
          %1061 = sbr.rel (%p1059) target = $region32
        $region31: #{tpu_custom_call.1} parent=23 // pred_region
          %s1062 = smul.u32 4, %s15
        $region32: #{tpu_custom_call.1} parent=23 // pred_fallthru
          _
      $region24: #{tpu_custom_call.1} parent=5 // pred_fallthru
        _
      %p1063 = scmp.le.s32.totalorder 2, %s10
      // Predicated region
      $region33: #{tpu_custom_call.1} parent=5 // pred_check
        %p1064 = pneg %p1063
      $region34: #{tpu_custom_call.1} parent=5 // pred_check_branch
        %1066 = sbr.rel (%p1064) target = $region36
      $region35: #{tpu_custom_call.1} parent=5 // pred_region
        %s1067 = ssub.s32 %s10, 2
        // Predicated region
        $region37: #{tpu_custom_call.1} parent=35 // pred_check
          %p1068 = pneg %p65
        $region38: #{tpu_custom_call.1} parent=35 // pred_check_branch
          %1070 = sbr.rel (%p1068) target = $region40
        $region39: #{tpu_custom_call.1} parent=35 // pred_region
          %s1071 = smul.u32 4, %s16
          %p1072 = scmp.lt.s32.totalorder %s1071, 7
          %s1073 = scalar_select %p1072, %s1071, 7
          %s1074 = smul.addr %s1073, 2
          %s1075 = scalar_lea.vmem %s1, %s1074
        $region40: #{tpu_custom_call.1} parent=35 // pred_fallthru
          _
      $region36: #{tpu_custom_call.1} parent=5 // pred_fallthru
        _
    $region6: #{tpu_custom_call.1} parent=1 // loop_footer
      %s14 = sadd.s32 1, %s10
    $region7: #{tpu_custom_call.1} parent=1 // loop_footer_branch
      %9 = sbr.rel target = $region3
    $region8: #{tpu_custom_call.1} parent=1 // loop_exit
      _
    %1076 = vsyncpa [#allocation4], 1
    %s1077 = scalar_lea.sflag [#allocation4], 1
    %1078 = vsyncpa %s1077, 1

</llo_original>
